<compile_context>
chip_gen: v7x
topology: tpu7x:2x2x1
jax: 0.10.0
libtpu: 0.0.40
codegen_flags: <defaults>
</compile_context>

<pallas_src>
import jax
import jax.numpy as jnp
from jax import lax
from jax.experimental import pallas as pl
from jax.experimental.pallas import tpu as pltpu

F32 = jnp.float32
BF16 = jnp.bfloat16
EPS = 1e-5


# ------------------------------ Pallas kernel ------------------------------

def _transition_kernel(x_ref, s_ref, t_ref, w_ref, b_ref, o_ref):
    # x_ref: (bm, 4*C) f32    one row per OUTPUT pixel; the 2x2 input patch is
    #                         flattened into the channel (contraction) axis
    # s_ref: (1, 4*C) f32     folded eval-mode BN scale (tiled 4x)
    # t_ref: (1, 4*C) f32     folded eval-mode BN shift (tiled 4x)
    # w_ref: (4*C, Cp) bf16   1x1-conv weight tiled 4x along K, Cp = pad128(Cout)
    # b_ref: (1, Cp)   f32    conv bias (zero-padded to Cp)
    # o_ref: (bm, Cp)  f32    pooled output, lane-dense
    y = x_ref[...] * s_ref[...] + t_ref[...]          # BN (eval, folded) - VPU
    y = y * jax.nn.sigmoid(y)                         # SiLU - sigmoid on EUP
    z = jnp.dot(y.astype(BF16), w_ref[...],           # bf16 MXU, f32 accumulate
                preferred_element_type=jnp.float32)
    # contraction already summed the 4 pixels of the 2x2 window ->
    # 0.25 * z + b  ==  AvgPool2d(2,2)(Conv1x1(SiLU(BN(x))))
    o_ref[...] = 0.25 * z + b_ref[...]


# ------------------------------ tiling helper ------------------------------

def _round_up(x, m):
    return (x + m - 1) // m * m


def _pick_row_tile(M, K, Cp, budget_bytes=24 << 20):
    """Largest divisor of M that is a multiple of 8 (or == M), fits the
    double-buffered VMEM budget, and (when possible) leaves >= 2 grid steps
    so both v7x TensorCores get work.  Budget is conservative for v7x (64 MiB
    physical VMEM) and v5e's 16 MiB default scoped limit."""
    per_row = (K + Cp) * 4 * 2                        # f32 in + f32 out, x2 buffers
    fixed = K * Cp * 2 * 2 + (2 * K + Cp) * 4 * 2     # weights (bf16) + scale/shift/bias
    cap = max(8, (budget_bytes - fixed) // per_row)
    divs = [d for d in range(1, M + 1) if M % d == 0 and (d % 8 == 0 or d == M)]
    fitting = [d for d in divs if d <= cap]
    if not fitting:
        return min(divs)                              # degenerate fallback
    multi = [d for d in fitting if M // d >= 2]
    return max(multi) if multi else max(fitting)


# ------------------------------ wrapper ------------------------------

def transition_layer(x_nchw, gamma, beta, running_mean, running_var, w, b, *, eps=EPS):
    """TransitionLayer forward, PyTorch semantics (eval-mode BN), NCHW in/out.
    w: (C, Cout) 1x1-conv weight (Cout = C // 2), b: (Cout,)."""
    N, C, H, W = x_nchw.shape
    Cout = w.shape[1]
    Ho, Wo = H // 2, W // 2                           # AvgPool2d(2,2) floors
    x = x_nchw[:, :, :Ho * 2, :Wo * 2].astype(F32)    # crop == PyTorch floor behaviour

    # fold eval-mode BatchNorm into per-channel affine
    scale = (gamma / jnp.sqrt(running_var + eps)).astype(F32)
    shift = (beta - running_mean * scale).astype(F32)

    # gather each 2x2 pooling patch into the channel axis:
    # (n, c, 2ho+dh, 2wo+dw) -> row (n, ho, wo), col (dh, dw, c)
    # (this replaces the plain NCHW->NHWC transpose; same one-pass layout glue)
    xp = x.reshape(N, C, Ho, 2, Wo, 2)
    xp = jnp.transpose(xp, (0, 2, 4, 3, 5, 1)).reshape(N * Ho * Wo, 4 * C)

    K = 4 * C
    Cp = _round_up(Cout, 128)                         # lane-dense output width
    w4 = jnp.tile(w.astype(BF16), (4, 1))             # (4C, Cout): fold pool into K
    if Cp != Cout:
        w4 = jnp.pad(w4, ((0, 0), (0, Cp - Cout)))
        b_p = jnp.pad(b.astype(F32), (0, Cp - Cout))
    else:
        b_p = b.astype(F32)
    s4 = jnp.tile(scale, 4).reshape(1, K)
    t4 = jnp.tile(shift, 4).reshape(1, K)

    M = N * Ho * Wo
    bm = _pick_row_tile(M, K, Cp)

    out = pl.pallas_call(
        _transition_kernel,
        out_shape=jax.ShapeDtypeStruct((M, Cp), F32),
        grid=(M // bm,),
        in_specs=[
            pl.BlockSpec((bm, K), lambda i: (i, 0)),   # activations: tiled over rows
            pl.BlockSpec((1, K), lambda i: (0, 0)),    # BN scale (resident)
            pl.BlockSpec((1, K), lambda i: (0, 0)),    # BN shift (resident)
            pl.BlockSpec((K, Cp), lambda i: (0, 0)),   # conv weight (resident)
            pl.BlockSpec((1, Cp), lambda i: (0, 0)),   # conv bias (resident)
        ],
        out_specs=pl.BlockSpec((bm, Cp), lambda i: (i, 0)),
        compiler_params=pltpu.CompilerParams(
            dimension_semantics=("parallel",),         # v7x: shard row grid over 2 TCs
            vmem_limit_bytes=48 * 1024 * 1024),        # safe on v5e/v6e/v7x
    )(xp, s4, t4, w4, b_p.reshape(1, Cp))

    out = out[:, :Cout]                                # drop lane padding (no-op if dense)
    out = out.reshape(N, Ho, Wo, Cout)
    return jnp.transpose(out, (0, 3, 1, 2))            # back to NCHW


# ------------------------------ pure-JAX reference ------------------------------

def transition_reference(x, gamma, beta, mean, var, w, b, eps=EPS):
    scale = gamma / jnp.sqrt(var + eps)
    shift = beta - mean * scale
    y = x * scale[None, :, None, None] + shift[None, :, None, None]
    y = y * jax.nn.sigmoid(y)                          # SiLU
    z = jnp.einsum('nchw,co->nohw', y, w,
                   precision=lax.Precision.HIGHEST) + b[None, :, None, None]
    N, O, H, W = z.shape
    return z[:, :, :H // 2 * 2, :W // 2 * 2].reshape(
        N, O, H // 2, 2, W // 2, 2).mean(axis=(3, 5))  # AvgPool2d(2, 2)


# ------------------------------ demo / check ------------------------------

if __name__ == "__main__":
    key = jax.random.PRNGKey(0)

    def make_params(k, c, cout):
        ks = jax.random.split(k, 6)
        gamma = 1.0 + 0.1 * jax.random.normal(ks[0], (c,), F32)
        beta = 0.1 * jax.random.normal(ks[1], (c,), F32)
        mean = 0.1 * jax.random.normal(ks[2], (c,), F32)
        var = 1.0 + 0.1 * jnp.abs(jax.random.normal(ks[3], (c,), F32))
        bound = 1.0 / (c ** 0.5)
        w = jax.random.uniform(ks[4], (c, cout), F32, -bound, bound)
        b = jax.random.uniform(ks[5], (cout,), F32, -bound, bound)
        return gamma, beta, mean, var, w, b

    fwd = jax.jit(transition_layer)

    # config 1: typical DenseNet transition width (lane-dense Cout = 128)
    # config 2: small / non-aligned Cout (exercises the pad-to-128 + slice path)
    for (n, c, h, w_sp) in [(2, 256, 16, 16), (1, 48, 8, 8)]:
        key, kp, kx = jax.random.split(key, 3)
        params = make_params(kp, c, c // 2)
        x = jax.random.normal(kx, (n, c, h, w_sp), F32)      # NCHW like PyTorch

        out = jax.block_until_ready(fwd(x, *params))
        ref = transition_reference(x, *params)

        assert out.shape == (n, c // 2, h // 2, w_sp // 2), out.shape
        err = float(jnp.max(jnp.abs(out - ref)))
        # kernel uses bf16 MXU inputs with f32 accumulation (per perf review);
        # tolerance sized for bf16 quantization vs the f32 HIGHEST reference.
        assert jnp.allclose(out, ref, rtol=2e-2, atol=2e-2), err

    print("KERNEL_OK")
</pallas_src>

<mosaic_0001>
module attributes {stable_mosaic.version = 11 : i64} {
  func.func @_transition_kernel(%arg0: i32, %arg1: memref<64x1024xf32, #tpu.memory_space<vmem>>, %arg2: memref<1x1024xf32, #tpu.memory_space<vmem>>, %arg3: memref<1x1024xf32, #tpu.memory_space<vmem>>, %arg4: memref<1024x128xbf16, #tpu.memory_space<vmem>>, %arg5: memref<1x128xf32, #tpu.memory_space<vmem>>, %arg6: memref<64x128xf32, #tpu.memory_space<vmem>>) attributes {dimension_semantics = [#tpu.dimension_semantics<parallel>], iteration_bounds = array<i64: 2>, scalar_prefetch = 0 : i64, scratch_operands = 0 : i64, tpu.core_type = #tpu.core_type<tc>, window_params = [{transform_indices = @transform_0, window_bounds = array<i64: 64, 1024>}, {pipeline_mode = #tpu.pipeline_mode<synchronous>, transform_indices = @transform_1, window_bounds = array<i64: 1, 1024>}, {pipeline_mode = #tpu.pipeline_mode<synchronous>, transform_indices = @transform_2, window_bounds = array<i64: 1, 1024>}, {pipeline_mode = #tpu.pipeline_mode<synchronous>, transform_indices = @transform_3, window_bounds = array<i64: 1024, 128>}, {pipeline_mode = #tpu.pipeline_mode<synchronous>, transform_indices = @transform_4, window_bounds = array<i64: 1, 128>}, {transform_indices = @transform_5, window_bounds = array<i64: 64, 128>}]} {
    %c0 = arith.constant 0 : index
    %c0_0 = arith.constant 0 : index
    %0 = vector.load %arg1[%c0, %c0_0] : memref<64x1024xf32, #tpu.memory_space<vmem>>, vector<64x1024xf32>
    %c0_1 = arith.constant 0 : index
    %c0_2 = arith.constant 0 : index
    %1 = vector.load %arg2[%c0_1, %c0_2] : memref<1x1024xf32, #tpu.memory_space<vmem>>, vector<1x1024xf32>
    %2 = vector.broadcast %1 : vector<1x1024xf32> to vector<64x1024xf32>
    %3 = arith.mulf %0, %2 : vector<64x1024xf32>
    %c0_3 = arith.constant 0 : index
    %c0_4 = arith.constant 0 : index
    %4 = vector.load %arg3[%c0_3, %c0_4] : memref<1x1024xf32, #tpu.memory_space<vmem>>, vector<1x1024xf32>
    %5 = vector.broadcast %4 : vector<1x1024xf32> to vector<64x1024xf32>
    %6 = arith.addf %3, %5 : vector<64x1024xf32>
    %7 = arith.negf %6 : vector<64x1024xf32>
    %8 = math.exp %7 : vector<64x1024xf32>
    %cst = arith.constant 1.000000e+00 : f32
    %9 = vector.broadcast %cst : f32 to vector<64x1024xf32>
    %10 = arith.addf %9, %8 : vector<64x1024xf32>
    %11 = arith.divf %9, %10 : vector<64x1024xf32>
    %12 = arith.mulf %6, %11 : vector<64x1024xf32>
    %13 = arith.truncf %12 : vector<64x1024xf32> to vector<64x1024xbf16>
    %c0_5 = arith.constant 0 : index
    %c0_6 = arith.constant 0 : index
    %14 = vector.load %arg4[%c0_5, %c0_6] : memref<1024x128xbf16, #tpu.memory_space<vmem>>, vector<1024x128xbf16>
    %cst_7 = arith.constant dense<0.000000e+00> : vector<64x128xf32>
    %15 = tpu.matmul %13, %14, %cst_7 {dimension_numbers = #tpu.dot_dimension_numbers<[1], [0], [0], [1], [0, 0, 1, 1], [], []>} : vector<64x1024xbf16>, vector<1024x128xbf16>, vector<64x128xf32> -> vector<64x128xf32>
    %cst_8 = arith.constant 2.500000e-01 : f32
    %16 = vector.broadcast %cst_8 : f32 to vector<64x128xf32>
    %17 = arith.mulf %16, %15 : vector<64x128xf32>
    %c0_9 = arith.constant 0 : index
    %c0_10 = arith.constant 0 : index
    %18 = vector.load %arg5[%c0_9, %c0_10] : memref<1x128xf32, #tpu.memory_space<vmem>>, vector<1x128xf32>
    %19 = vector.broadcast %18 : vector<1x128xf32> to vector<64x128xf32>
    %20 = arith.addf %17, %19 : vector<64x128xf32>
    %c0_11 = arith.constant 0 : index
    %c0_12 = arith.constant 0 : index
    %21 = vector.load %arg6[%c0_11, %c0_12] : memref<64x128xf32, #tpu.memory_space<vmem>>, vector<64x128xf32>
    tpu.vector_store %arg6[%c0_11, %c0_12], %20 {strides = array<i32>} : memref<64x128xf32, #tpu.memory_space<vmem>>, vector<64x128xf32>,
    return
  }
  func.func @transform_0(%arg0: i32) -> (i32, i32) {
    %c0_i32 = arith.constant 0 : i32
    %c0_i32_0 = arith.constant 0 : i32
    return %arg0, %c0_i32 : i32, i32
  }
  func.func @transform_1(%arg0: i32) -> (i32, i32) {
    %c0_i32 = arith.constant 0 : i32
    %c0_i32_0 = arith.constant 0 : i32
    %c0_i32_1 = arith.constant 0 : i32
    return %c0_i32, %c0_i32_0 : i32, i32
  }
  func.func @transform_2(%arg0: i32) -> (i32, i32) {
    %c0_i32 = arith.constant 0 : i32
    %c0_i32_0 = arith.constant 0 : i32
    %c0_i32_1 = arith.constant 0 : i32
    return %c0_i32, %c0_i32_0 : i32, i32
  }
  func.func @transform_3(%arg0: i32) -> (i32, i32) {
    %c0_i32 = arith.constant 0 : i32
    %c0_i32_0 = arith.constant 0 : i32
    %c0_i32_1 = arith.constant 0 : i32
    return %c0_i32, %c0_i32_0 : i32, i32
  }
  func.func @transform_4(%arg0: i32) -> (i32, i32) {
    %c0_i32 = arith.constant 0 : i32
    %c0_i32_0 = arith.constant 0 : i32
    %c0_i32_1 = arith.constant 0 : i32
    return %c0_i32, %c0_i32_0 : i32, i32
  }
  func.func @transform_5(%arg0: i32) -> (i32, i32) {
    %c0_i32 = arith.constant 0 : i32
    %c0_i32_0 = arith.constant 0 : i32
    return %arg0, %c0_i32 : i32, i32
  }
}

</mosaic_0001>

<llo_original>
// kernel: transition_layer.1
$region0: #{transition_layer.1}
  #allocation0 [shape = 'u32[]', space=smem, size = 0x4, offset = 0x4, fixed_abs, tag = 'smem constant byte address 0x4 - core index']
  #allocation1 [shape = 'u32[144,128]{1,0:T(1,128)}', space=vmem, size = 0x12000, scoped, tag = 'internal scratch']
  %s0 = inlined_call_operand.vmem [shape: f32[128,1024], index: 0, kind: input, shape index: {}]
  %s1 = inlined_call_operand.vmem [shape: f32[1,1024], index: 1, kind: input, shape index: {}]
  %s2 = inlined_call_operand.vmem [shape: f32[1,1024], index: 2, kind: input, shape index: {}]
  %s3 = inlined_call_operand.vmem [shape: bf16[1024,128], index: 3, kind: input, shape index: {}]
  %s4 = inlined_call_operand.vmem [shape: f32[1,128], index: 4, kind: input, shape index: {}]
  %s5 = inlined_call_operand.hbm [shape: f32[128,128], index: 5, kind: output, shape index: {}]
  %s6 = sld [smem:[#allocation0]]
  $region53: #{transition_layer.1} parent=0
    _
  %s8 = ssub.s32 1, %s6
  %s9 = scalar_select 0, %s8, %s6
  $region1: #{transition_layer.1} parent=0
    #allocation2 [shape = 'u8[65536]{0}', space=vmem, size = 0x10000, scoped, tag = 'output window, operand 0']
    #allocation3 [shape = 's32[2]{0}', space=sflag, size = 0x8, scoped, tag = 'scoped memory for transition_layer.1']
    %10 = vsyncpa [#allocation3], 0
    %s11 = scalar_lea.sflag [#allocation3], 1
    %12 = vsyncpa %s11, 0
    loop: start=0, step=1, limit=4
    $region2: #{transition_layer.1} parent=1 // loop_pre_header
      _
    $region3: #{transition_layer.1} parent=1 // loop_header
      %s14 = sphi 0, %s18
      %p15 = scmp.ge.s32.totalorder %s14, 4
      %s24 = sphi 0, %s26
      %s27 = sphi 0, %s24
      %s28 = sphi 0, %s27
      %s44 = sphi 0, %s28
      %s48 = sphi 0, %s48
      %s50 = sphi 0, %s48
      %s51 = sphi 0, %s50
      %s65 = sphi 0, %s51
      %s69 = sphi 0, %s69
      %s71 = sphi 0, %s69
      %s72 = sphi 0, %s71
      %s86 = sphi 0, %s72
      %s90 = sphi 0, %s90
      %s92 = sphi 0, %s90
      %s93 = sphi 0, %s92
      %s107 = sphi 0, %s93
      %s111 = sphi 0, %s111
      %s113 = sphi 0, %s111
      %s114 = sphi 0, %s113
      %s128 = sphi 0, %s114
      %s134 = sphi 0, %s136
      %s137 = sphi 0, %s134
      %s138 = sphi 0, %s137
      %s154 = sphi 0, %s138
    $region4: #{transition_layer.1} parent=1 // loop_header_branch
      %17 = sbr.rel (%p15) target = $region8
    $region5: #{transition_layer.1} parent=1 // loop_body
      %s19 = ssub.s32 %s14, 1
      %s20 = ssub.s32 %s14, 2
      %s21 = sadd.s32 %s14, 1
      %s22 = ssub.s32 %s14, %s21
      %p23 = scmp.eq.s32.totalorder %s22, 0
      %s25 = sadd.s32 %s24, 1
      %s26 = scalar_select %p23, %s24, %s25
      %p29 = pneg %p23
      %p30 = scmp.eq.s32.totalorder %s14, 1
      %p31 = por %p29, %p30
      %p32 = scmp.ne.s32.totalorder %s24, %s27
      %p33 = scmp.eq.s32.totalorder %s14, 0
      %p34 = por %p32, %p33
      %p35 = scmp.ne.s32.totalorder %s24, %s27
      %p36 = scmp.eq.s32.totalorder %s19, 1
      %p37 = por %p35, %p36
      %p38 = scmp.ne.s32.totalorder %s27, %s28
      %p39 = scmp.eq.s32.totalorder %s19, 0
      %p40 = por %p38, %p39
      %p41 = scmp.ne.s32.totalorder %s27, %s28
      %p42 = scmp.eq.s32.totalorder %s20, 1
      %p43 = por %p41, %p42
      %p45 = scmp.ne.s32.totalorder %s28, %s44
      %p46 = scmp.eq.s32.totalorder %s20, 0
      %p47 = por %p45, %p46
      %s49 = sadd.s32 %s48, 1
      %p52 = scmp.eq.s32.totalorder %s14, 1
      %p53 = scmp.ne.s32.totalorder %s48, %s50
      %p54 = scmp.eq.s32.totalorder %s14, 0
      %p55 = por %p53, %p54
      %p56 = scmp.ne.s32.totalorder %s48, %s50
      %p57 = scmp.eq.s32.totalorder %s19, 1
      %p58 = por %p56, %p57
      %p59 = scmp.ne.s32.totalorder %s50, %s51
      %p60 = scmp.eq.s32.totalorder %s19, 0
      %p61 = por %p59, %p60
      %p62 = scmp.ne.s32.totalorder %s50, %s51
      %p63 = scmp.eq.s32.totalorder %s20, 1
      %p64 = por %p62, %p63
      %p66 = scmp.ne.s32.totalorder %s51, %s65
      %p67 = scmp.eq.s32.totalorder %s20, 0
      %p68 = por %p66, %p67
      %s70 = sadd.s32 %s69, 1
      %p73 = scmp.eq.s32.totalorder %s14, 1
      %p74 = scmp.ne.s32.totalorder %s69, %s71
      %p75 = scmp.eq.s32.totalorder %s14, 0
      %p76 = por %p74, %p75
      %p77 = scmp.ne.s32.totalorder %s69, %s71
      %p78 = scmp.eq.s32.totalorder %s19, 1
      %p79 = por %p77, %p78
      %p80 = scmp.ne.s32.totalorder %s71, %s72
      %p81 = scmp.eq.s32.totalorder %s19, 0
      %p82 = por %p80, %p81
      %p83 = scmp.ne.s32.totalorder %s71, %s72
      %p84 = scmp.eq.s32.totalorder %s20, 1
      %p85 = por %p83, %p84
      %p87 = scmp.ne.s32.totalorder %s72, %s86
      %p88 = scmp.eq.s32.totalorder %s20, 0
      %p89 = por %p87, %p88
      %s91 = sadd.s32 %s90, 1
      %p94 = scmp.eq.s32.totalorder %s14, 1
      %p95 = scmp.ne.s32.totalorder %s90, %s92
      %p96 = scmp.eq.s32.totalorder %s14, 0
      %p97 = por %p95, %p96
      %p98 = scmp.ne.s32.totalorder %s90, %s92
      %p99 = scmp.eq.s32.totalorder %s19, 1
      %p100 = por %p98, %p99
      %p101 = scmp.ne.s32.totalorder %s92, %s93
      %p102 = scmp.eq.s32.totalorder %s19, 0
      %p103 = por %p101, %p102
      %p104 = scmp.ne.s32.totalorder %s92, %s93
      %p105 = scmp.eq.s32.totalorder %s20, 1
      %p106 = por %p104, %p105
      %p108 = scmp.ne.s32.totalorder %s93, %s107
      %p109 = scmp.eq.s32.totalorder %s20, 0
      %p110 = por %p108, %p109
      %s112 = sadd.s32 %s111, 1
      %p115 = scmp.eq.s32.totalorder %s14, 1
      %p116 = scmp.ne.s32.totalorder %s111, %s113
      %p117 = scmp.eq.s32.totalorder %s14, 0
      %p118 = por %p116, %p117
      %p119 = scmp.ne.s32.totalorder %s111, %s113
      %p120 = scmp.eq.s32.totalorder %s19, 1
      %p121 = por %p119, %p120
      %p122 = scmp.ne.s32.totalorder %s113, %s114
      %p123 = scmp.eq.s32.totalorder %s19, 0
      %p124 = por %p122, %p123
      %p125 = scmp.ne.s32.totalorder %s113, %s114
      %p126 = scmp.eq.s32.totalorder %s20, 1
      %p127 = por %p125, %p126
      %p129 = scmp.ne.s32.totalorder %s114, %s128
      %p130 = scmp.eq.s32.totalorder %s20, 0
      %p131 = por %p129, %p130
      %s132 = ssub.s32 %s14, %s21
      %p133 = scmp.eq.s32.totalorder %s132, 0
      %s135 = sadd.s32 %s134, 1
      %s136 = scalar_select %p133, %s134, %s135
      %p139 = pneg %p133
      %p140 = scmp.eq.s32.totalorder %s14, 1
      %p141 = por %p139, %p140
      %p142 = scmp.ne.s32.totalorder %s134, %s137
      %p143 = scmp.eq.s32.totalorder %s14, 0
      %p144 = por %p142, %p143
      %p145 = scmp.ne.s32.totalorder %s134, %s137
      %p146 = scmp.eq.s32.totalorder %s19, 1
      %p147 = por %p145, %p146
      %p148 = scmp.ne.s32.totalorder %s137, %s138
      %p149 = scmp.eq.s32.totalorder %s19, 0
      %p150 = por %p148, %p149
      %p151 = scmp.ne.s32.totalorder %s137, %s138
      %p152 = scmp.eq.s32.totalorder %s20, 1
      %p153 = por %p151, %p152
      %p155 = scmp.ne.s32.totalorder %s138, %s154
      %p156 = scmp.eq.s32.totalorder %s20, 0
      %p157 = por %p155, %p156
      %p158 = scmp.le.s32.totalorder 1, %s14
      %p159 = scmp.lt.s32.totalorder %s14, 3
      %p160 = pnand %p158, %p159
      %p161 = pneg %p160
      // Predicated region
      $region9: #{transition_layer.1} parent=5 // pred_check
        _
      $region10: #{transition_layer.1} parent=5 // pred_check_branch
        %163 = sbr.rel (%p160) target = $region12
      $region11: #{transition_layer.1} parent=5 // pred_region
        %s164 = ssub.s32 %s14, 1
        // Predicated region
        $region13: #{transition_layer.1} parent=11 // pred_check
          %p165 = pneg %p61
        $region14: #{transition_layer.1} parent=11 // pred_check_branch
          %167 = sbr.rel (%p165) target = $region16
        $region15: #{transition_layer.1} parent=11 // pred_region
          _
        $region16: #{transition_layer.1} parent=11 // pred_fallthru
          _
        // Predicated region
        $region17: #{transition_layer.1} parent=11 // pred_check
          %p168 = pneg %p82
        $region18: #{transition_layer.1} parent=11 // pred_check_branch
          %170 = sbr.rel (%p168) target = $region20
        $region19: #{transition_layer.1} parent=11 // pred_region
          _
        $region20: #{transition_layer.1} parent=11 // pred_fallthru
          _
        // Predicated region
        $region21: #{transition_layer.1} parent=11 // pred_check
          %p171 = pneg %p103
        $region22: #{transition_layer.1} parent=11 // pred_check_branch
          %173 = sbr.rel (%p171) target = $region24
        $region23: #{transition_layer.1} parent=11 // pred_region
          _
        $region24: #{transition_layer.1} parent=11 // pred_fallthru
          _
        // Predicated region
        $region25: #{transition_layer.1} parent=11 // pred_check
          %p174 = pneg %p124
        $region26: #{transition_layer.1} parent=11 // pred_check_branch
          %176 = sbr.rel (%p174) target = $region28
        $region27: #{transition_layer.1} parent=11 // pred_region
          _
        $region28: #{transition_layer.1} parent=11 // pred_fallthru
          _
      $region12: #{transition_layer.1} parent=5 // pred_fallthru
        _
      %p177 = scmp.lt.s32.totalorder %s14, 2
      // Predicated region
      $region29: #{transition_layer.1} parent=5 // pred_check
        %p178 = pneg %p177
      $region30: #{transition_layer.1} parent=5 // pred_check_branch
        %180 = sbr.rel (%p178) target = $region32
      $region31: #{transition_layer.1} parent=5 // pred_region
        // Predicated region
        $region33: #{transition_layer.1} parent=31 // pred_check
          %p181 = pneg %p34
        $region34: #{transition_layer.1} parent=31 // pred_check_branch
          %183 = sbr.rel (%p181) target = $region36
        $region35: #{transition_layer.1} parent=31 // pred_region
          %s184 = smul.u32 8, %s14
          %p185 = scmp.lt.s32.totalorder %s184, 15
          %s186 = scalar_select %p185, %s184, 15
          %s187 = smul.addr %s186, 8
          %s188 = smul.addr %s187, 8
          %s189 = scalar_lea.vmem %s0, %s188
          %s190 = smul.u32 8, %s14
        $region36: #{transition_layer.1} parent=31 // pred_fallthru
          _
      $region32: #{transition_layer.1} parent=5 // pred_fallthru
        _
      %p191 = scmp.le.s32.totalorder 1, %s14
      %p192 = scmp.lt.s32.totalorder %s14, 3
      %p193 = pnand %p191, %p192
      %p194 = pneg %p193
      // Predicated region
      $region37: #{transition_layer.1} parent=5 // pred_check
        _
      $region38: #{transition_layer.1} parent=5 // pred_check_branch
        %196 = sbr.rel (%p193) target = $region40
      $region39: #{transition_layer.1} parent=5 // pred_region
        %s197 = ssub.s32 %s14, 1
        %s198 = smul.u32 8, %s19
        %p199 = scmp.lt.s32.totalorder %s198, 15
        %s200 = scalar_select %p199, %s198, 15
        %s201 = smul.addr %s200, 8
        %s202 = smul.addr %s201, 8
        %s203 = scalar_lea.vmem %s0, %s202
        %p204 = pneg %p40
        %p205 = pneg %p37
        %p206 = pneg %p61
        %p207 = pneg %p58
        %p208 = pneg %p82
        %p209 = pneg %p79
        %p210 = pneg %p103
        %p211 = pneg %p100
        %p212 = pneg %p124
        %p213 = pneg %p121
        %p214 = pneg %p150
        %p215 = pneg %p147
        %s216 = sand.u32 %s137, 1
        %s217 = scalar_lea.sflag [#allocation3], %s216
        %s218 = sand.u32 %s137, 1
        %s219 = smul.addr %s218, 64
        %s220 = scalar_lea.vmem [#allocation2], %s219
        %s221 = smul.u32 8, %s19
        %p222 = scmp.lt.s32.totalorder %s221, 15
        %s223 = scalar_select %p222, %s221, 15
        %s224 = smul.addr %s223, 8
        %s225 = smul.addr %s224, 8
        %s226 = scalar_lea.vmem %s0, %s225
        %s227 = smul.u32 8, %s19
        %s228 = smul.u32 8, %s19
        %v230 = vld [vmem:[%s226] sm:$0xff]
        %v231 = vld [vmem:[%s226 + $0x8] sm:$0xff]
        %v232 = vld [vmem:[%s226 + $0x10] sm:$0xff]
        %v233 = vld [vmem:[%s226 + $0x18] sm:$0xff]
        %v234 = vld [vmem:[%s226 + $0x20] sm:$0xff]
        %v235 = vld [vmem:[%s226 + $0x28] sm:$0xff]
        %v236 = vld [vmem:[%s226 + $0x30] sm:$0xff]
        %v237 = vld [vmem:[%s226 + $0x38] sm:$0xff]
        %v238 = vld [vmem:[%s226 + $0x40] sm:$0xff]
        %v239 = vld [vmem:[%s226 + $0x48] sm:$0xff]
        %v240 = vld [vmem:[%s226 + $0x50] sm:$0xff]
        %v241 = vld [vmem:[%s226 + $0x58] sm:$0xff]
        %v242 = vld [vmem:[%s226 + $0x60] sm:$0xff]
        %v243 = vld [vmem:[%s226 + $0x68] sm:$0xff]
        %v244 = vld [vmem:[%s226 + $0x70] sm:$0xff]
        %v245 = vld [vmem:[%s226 + $0x78] sm:$0xff]
        %v246 = vld [vmem:[%s226 + $0x80] sm:$0xff]
        %v247 = vld [vmem:[%s226 + $0x88] sm:$0xff]
        %v248 = vld [vmem:[%s226 + $0x90] sm:$0xff]
        %v249 = vld [vmem:[%s226 + $0x98] sm:$0xff]
        %v250 = vld [vmem:[%s226 + $0xa0] sm:$0xff]
        %v251 = vld [vmem:[%s226 + $0xa8] sm:$0xff]
        %v252 = vld [vmem:[%s226 + $0xb0] sm:$0xff]
        %v253 = vld [vmem:[%s226 + $0xb8] sm:$0xff]
        %v254 = vld [vmem:[%s226 + $0xc0] sm:$0xff]
        %v255 = vld [vmem:[%s226 + $0xc8] sm:$0xff]
        %v256 = vld [vmem:[%s226 + $0xd0] sm:$0xff]
        %v257 = vld [vmem:[%s226 + $0xd8] sm:$0xff]
        %v258 = vld [vmem:[%s226 + $0xe0] sm:$0xff]
        %v259 = vld [vmem:[%s226 + $0xe8] sm:$0xff]
        %v260 = vld [vmem:[%s226 + $0xf0] sm:$0xff]
        %v261 = vld [vmem:[%s226 + $0xf8] sm:$0xff]
        %v262 = vld [vmem:[%s226 + $0x100] sm:$0xff]
        %v263 = vld [vmem:[%s226 + $0x108] sm:$0xff]
        %v264 = vld [vmem:[%s226 + $0x110] sm:$0xff]
        %v265 = vld [vmem:[%s226 + $0x118] sm:$0xff]
        %v266 = vld [vmem:[%s226 + $0x120] sm:$0xff]
        %v267 = vld [vmem:[%s226 + $0x128] sm:$0xff]
        %v268 = vld [vmem:[%s226 + $0x130] sm:$0xff]
        %v269 = vld [vmem:[%s226 + $0x138] sm:$0xff]
        %v270 = vld [vmem:[%s226 + $0x140] sm:$0xff]
        %v271 = vld [vmem:[%s226 + $0x148] sm:$0xff]
        %v272 = vld [vmem:[%s226 + $0x150] sm:$0xff]
        %v273 = vld [vmem:[%s226 + $0x158] sm:$0xff]
        %v274 = vld [vmem:[%s226 + $0x160] sm:$0xff]
        %v275 = vld [vmem:[%s226 + $0x168] sm:$0xff]
        %v276 = vld [vmem:[%s226 + $0x170] sm:$0xff]
        %v277 = vld [vmem:[%s226 + $0x178] sm:$0xff]
        %v278 = vld [vmem:[%s226 + $0x180] sm:$0xff]
        %v279 = vld [vmem:[%s226 + $0x188] sm:$0xff]
        %v280 = vld [vmem:[%s226 + $0x190] sm:$0xff]
        %v281 = vld [vmem:[%s226 + $0x198] sm:$0xff]
        %v282 = vld [vmem:[%s226 + $0x1a0] sm:$0xff]
        %v283 = vld [vmem:[%s226 + $0x1a8] sm:$0xff]
        %v284 = vld [vmem:[%s226 + $0x1b0] sm:$0xff]
        %v285 = vld [vmem:[%s226 + $0x1b8] sm:$0xff]
        %v286 = vld [vmem:[%s226 + $0x1c0] sm:$0xff]
        %v287 = vld [vmem:[%s226 + $0x1c8] sm:$0xff]
        %v288 = vld [vmem:[%s226 + $0x1d0] sm:$0xff]
        %v289 = vld [vmem:[%s226 + $0x1d8] sm:$0xff]
        %v290 = vld [vmem:[%s226 + $0x1e0] sm:$0xff]
        %v291 = vld [vmem:[%s226 + $0x1e8] sm:$0xff]
        %v292 = vld [vmem:[%s226 + $0x1f0] sm:$0xff]
        %v293 = vld [vmem:[%s226 + $0x1f8] sm:$0xff]
        %v294 = vld [vmem:[%s1] sm:$0xff]
        %v296 = vlaneseq
        %v297 = vshrl.u32 %v296, 7
        %v298 = vsub.s32 0, %v297
        %v299 = vrot.slane %v294, %v298
        %v300 = vlaneseq
        %v301 = vshrl.u32 %v300, 7
        %v302 = vsub.s32 1, %v301
        %v303 = vrot.slane %v294, %v302
        %v304 = vlaneseq
        %v305 = vshrl.u32 %v304, 7
        %v306 = vsub.s32 2, %v305
        %v307 = vrot.slane %v294, %v306
        %v308 = vlaneseq
        %v309 = vshrl.u32 %v308, 7
        %v310 = vsub.s32 3, %v309
        %v311 = vrot.slane %v294, %v310
        %v312 = vlaneseq
        %v313 = vshrl.u32 %v312, 7
        %v314 = vsub.s32 4, %v313
        %v315 = vrot.slane %v294, %v314
        %v316 = vlaneseq
        %v317 = vshrl.u32 %v316, 7
        %v318 = vsub.s32 5, %v317
        %v319 = vrot.slane %v294, %v318
        %v320 = vlaneseq
        %v321 = vshrl.u32 %v320, 7
        %v322 = vsub.s32 6, %v321
        %v323 = vrot.slane %v294, %v322
        %v324 = vlaneseq
        %v325 = vshrl.u32 %v324, 7
        %v326 = vsub.s32 7, %v325
        %v327 = vrot.slane %v294, %v326
        %v336 = vmul.f32 %v230, %v299
        %v337 = vmul.f32 %v231, %v303
        %v338 = vmul.f32 %v232, %v307
        %v339 = vmul.f32 %v233, %v311
        %v340 = vmul.f32 %v234, %v315
        %v341 = vmul.f32 %v235, %v319
        %v342 = vmul.f32 %v236, %v323
        %v343 = vmul.f32 %v237, %v327
        %v344 = vmul.f32 %v238, %v299
        %v345 = vmul.f32 %v239, %v303
        %v346 = vmul.f32 %v240, %v307
        %v347 = vmul.f32 %v241, %v311
        %v348 = vmul.f32 %v242, %v315
        %v349 = vmul.f32 %v243, %v319
        %v350 = vmul.f32 %v244, %v323
        %v351 = vmul.f32 %v245, %v327
        %v352 = vmul.f32 %v246, %v299
        %v353 = vmul.f32 %v247, %v303
        %v354 = vmul.f32 %v248, %v307
        %v355 = vmul.f32 %v249, %v311
        %v356 = vmul.f32 %v250, %v315
        %v357 = vmul.f32 %v251, %v319
        %v358 = vmul.f32 %v252, %v323
        %v359 = vmul.f32 %v253, %v327
        %v360 = vmul.f32 %v254, %v299
        %v361 = vmul.f32 %v255, %v303
        %v362 = vmul.f32 %v256, %v307
        %v363 = vmul.f32 %v257, %v311
        %v364 = vmul.f32 %v258, %v315
        %v365 = vmul.f32 %v259, %v319
        %v366 = vmul.f32 %v260, %v323
        %v367 = vmul.f32 %v261, %v327
        %v368 = vmul.f32 %v262, %v299
        %v369 = vmul.f32 %v263, %v303
        %v370 = vmul.f32 %v264, %v307
        %v371 = vmul.f32 %v265, %v311
        %v372 = vmul.f32 %v266, %v315
        %v373 = vmul.f32 %v267, %v319
        %v374 = vmul.f32 %v268, %v323
        %v375 = vmul.f32 %v269, %v327
        %v376 = vmul.f32 %v270, %v299
        %v377 = vmul.f32 %v271, %v303
        %v378 = vmul.f32 %v272, %v307
        %v379 = vmul.f32 %v273, %v311
        %v380 = vmul.f32 %v274, %v315
        %v381 = vmul.f32 %v275, %v319
        %v382 = vmul.f32 %v276, %v323
        %v383 = vmul.f32 %v277, %v327
        %v384 = vmul.f32 %v278, %v299
        %v385 = vmul.f32 %v279, %v303
        %v386 = vmul.f32 %v280, %v307
        %v387 = vmul.f32 %v281, %v311
        %v388 = vmul.f32 %v282, %v315
        %v389 = vmul.f32 %v283, %v319
        %v390 = vmul.f32 %v284, %v323
        %v391 = vmul.f32 %v285, %v327
        %v392 = vmul.f32 %v286, %v299
        %v393 = vmul.f32 %v287, %v303
        %v394 = vmul.f32 %v288, %v307
        %v395 = vmul.f32 %v289, %v311
        %v396 = vmul.f32 %v290, %v315
        %v397 = vmul.f32 %v291, %v319
        %v398 = vmul.f32 %v292, %v323
        %v399 = vmul.f32 %v293, %v327
        %v400 = vld [vmem:[%s2] sm:$0xff]
        %v402 = vlaneseq
        %v403 = vshrl.u32 %v402, 7
        %v404 = vsub.s32 0, %v403
        %v405 = vrot.slane %v400, %v404
        %v406 = vlaneseq
        %v407 = vshrl.u32 %v406, 7
        %v408 = vsub.s32 1, %v407
        %v409 = vrot.slane %v400, %v408
        %v410 = vlaneseq
        %v411 = vshrl.u32 %v410, 7
        %v412 = vsub.s32 2, %v411
        %v413 = vrot.slane %v400, %v412
        %v414 = vlaneseq
        %v415 = vshrl.u32 %v414, 7
        %v416 = vsub.s32 3, %v415
        %v417 = vrot.slane %v400, %v416
        %v418 = vlaneseq
        %v419 = vshrl.u32 %v418, 7
        %v420 = vsub.s32 4, %v419
        %v421 = vrot.slane %v400, %v420
        %v422 = vlaneseq
        %v423 = vshrl.u32 %v422, 7
        %v424 = vsub.s32 5, %v423
        %v425 = vrot.slane %v400, %v424
        %v426 = vlaneseq
        %v427 = vshrl.u32 %v426, 7
        %v428 = vsub.s32 6, %v427
        %v429 = vrot.slane %v400, %v428
        %v430 = vlaneseq
        %v431 = vshrl.u32 %v430, 7
        %v432 = vsub.s32 7, %v431
        %v433 = vrot.slane %v400, %v432
        %v442 = vadd.f32 %v336, %v405
        %v443 = vadd.f32 %v337, %v409
        %v444 = vadd.f32 %v338, %v413
        %v445 = vadd.f32 %v339, %v417
        %v446 = vadd.f32 %v340, %v421
        %v447 = vadd.f32 %v341, %v425
        %v448 = vadd.f32 %v342, %v429
        %v449 = vadd.f32 %v343, %v433
        %v450 = vadd.f32 %v344, %v405
        %v451 = vadd.f32 %v345, %v409
        %v452 = vadd.f32 %v346, %v413
        %v453 = vadd.f32 %v347, %v417
        %v454 = vadd.f32 %v348, %v421
        %v455 = vadd.f32 %v349, %v425
        %v456 = vadd.f32 %v350, %v429
        %v457 = vadd.f32 %v351, %v433
        %v458 = vadd.f32 %v352, %v405
        %v459 = vadd.f32 %v353, %v409
        %v460 = vadd.f32 %v354, %v413
        %v461 = vadd.f32 %v355, %v417
        %v462 = vadd.f32 %v356, %v421
        %v463 = vadd.f32 %v357, %v425
        %v464 = vadd.f32 %v358, %v429
        %v465 = vadd.f32 %v359, %v433
        %v466 = vadd.f32 %v360, %v405
        %v467 = vadd.f32 %v361, %v409
        %v468 = vadd.f32 %v362, %v413
        %v469 = vadd.f32 %v363, %v417
        %v470 = vadd.f32 %v364, %v421
        %v471 = vadd.f32 %v365, %v425
        %v472 = vadd.f32 %v366, %v429
        %v473 = vadd.f32 %v367, %v433
        %v474 = vadd.f32 %v368, %v405
        %v475 = vadd.f32 %v369, %v409
        %v476 = vadd.f32 %v370, %v413
        %v477 = vadd.f32 %v371, %v417
        %v478 = vadd.f32 %v372, %v421
        %v479 = vadd.f32 %v373, %v425
        %v480 = vadd.f32 %v374, %v429
        %v481 = vadd.f32 %v375, %v433
        %v482 = vadd.f32 %v376, %v405
        %v483 = vadd.f32 %v377, %v409
        %v484 = vadd.f32 %v378, %v413
        %v485 = vadd.f32 %v379, %v417
        %v486 = vadd.f32 %v380, %v421
        %v487 = vadd.f32 %v381, %v425
        %v488 = vadd.f32 %v382, %v429
        %v489 = vadd.f32 %v383, %v433
        %v490 = vadd.f32 %v384, %v405
        %v491 = vadd.f32 %v385, %v409
        %v492 = vadd.f32 %v386, %v413
        %v493 = vadd.f32 %v387, %v417
        %v494 = vadd.f32 %v388, %v421
        %v495 = vadd.f32 %v389, %v425
        %v496 = vadd.f32 %v390, %v429
        %v497 = vadd.f32 %v391, %v433
        %v498 = vadd.f32 %v392, %v405
        %v499 = vadd.f32 %v393, %v409
        %v500 = vadd.f32 %v394, %v413
        %v501 = vadd.f32 %v395, %v417
        %v502 = vadd.f32 %v396, %v421
        %v503 = vadd.f32 %v397, %v425
        %v504 = vadd.f32 %v398, %v429
        %v505 = vadd.f32 %v399, %v433
        %v506 = vxor.u32 %v442, 2147483648
        %v507 = vxor.u32 %v443, 2147483648
        %v508 = vxor.u32 %v444, 2147483648
        %v509 = vxor.u32 %v445, 2147483648
        %v510 = vxor.u32 %v446, 2147483648
        %v511 = vxor.u32 %v447, 2147483648
        %v512 = vxor.u32 %v448, 2147483648
        %v513 = vxor.u32 %v449, 2147483648
        %v514 = vxor.u32 %v450, 2147483648
        %v515 = vxor.u32 %v451, 2147483648
        %v516 = vxor.u32 %v452, 2147483648
        %v517 = vxor.u32 %v453, 2147483648
        %v518 = vxor.u32 %v454, 2147483648
        %v519 = vxor.u32 %v455, 2147483648
        %v520 = vxor.u32 %v456, 2147483648
        %v521 = vxor.u32 %v457, 2147483648
        %v522 = vxor.u32 %v458, 2147483648
        %v523 = vxor.u32 %v459, 2147483648
        %v524 = vxor.u32 %v460, 2147483648
        %v525 = vxor.u32 %v461, 2147483648
        %v526 = vxor.u32 %v462, 2147483648
        %v527 = vxor.u32 %v463, 2147483648
        %v528 = vxor.u32 %v464, 2147483648
        %v529 = vxor.u32 %v465, 2147483648
        %v530 = vxor.u32 %v466, 2147483648
        %v531 = vxor.u32 %v467, 2147483648
        %v532 = vxor.u32 %v468, 2147483648
        %v533 = vxor.u32 %v469, 2147483648
        %v534 = vxor.u32 %v470, 2147483648
        %v535 = vxor.u32 %v471, 2147483648
        %v536 = vxor.u32 %v472, 2147483648
        %v537 = vxor.u32 %v473, 2147483648
        %v538 = vxor.u32 %v474, 2147483648
        %v539 = vxor.u32 %v475, 2147483648
        %v540 = vxor.u32 %v476, 2147483648
        %v541 = vxor.u32 %v477, 2147483648
        %v542 = vxor.u32 %v478, 2147483648
        %v543 = vxor.u32 %v479, 2147483648
        %v544 = vxor.u32 %v480, 2147483648
        %v545 = vxor.u32 %v481, 2147483648
        %v546 = vxor.u32 %v482, 2147483648
        %v547 = vxor.u32 %v483, 2147483648
        %v548 = vxor.u32 %v484, 2147483648
        %v549 = vxor.u32 %v485, 2147483648
        %v550 = vxor.u32 %v486, 2147483648
        %v551 = vxor.u32 %v487, 2147483648
        %v552 = vxor.u32 %v488, 2147483648
        %v553 = vxor.u32 %v489, 2147483648
        %v554 = vxor.u32 %v490, 2147483648
        %v555 = vxor.u32 %v491, 2147483648
        %v556 = vxor.u32 %v492, 2147483648
        %v557 = vxor.u32 %v493, 2147483648
        %v558 = vxor.u32 %v494, 2147483648
        %v559 = vxor.u32 %v495, 2147483648
        %v560 = vxor.u32 %v496, 2147483648
        %v561 = vxor.u32 %v497, 2147483648
        %v562 = vxor.u32 %v498, 2147483648
        %v563 = vxor.u32 %v499, 2147483648
        %v564 = vxor.u32 %v500, 2147483648
        %v565 = vxor.u32 %v501, 2147483648
        %v566 = vxor.u32 %v502, 2147483648
        %v567 = vxor.u32 %v503, 2147483648
        %v568 = vxor.u32 %v504, 2147483648
        %v569 = vxor.u32 %v505, 2147483648
        %v570 = vmul.f32 %v506, 1.442695
        %v571 = vpow.pop %v570
        %v572 = vmul.f32 %v507, 1.442695
        %v573 = vpow.pop %v572
        %v574 = vmul.f32 %v508, 1.442695
        %v575 = vpow.pop %v574
        %v576 = vmul.f32 %v509, 1.442695
        %v577 = vpow.pop %v576
        %v578 = vmul.f32 %v510, 1.442695
        %v579 = vpow.pop %v578
        %v580 = vmul.f32 %v511, 1.442695
        %v581 = vpow.pop %v580
        %v582 = vmul.f32 %v512, 1.442695
        %v583 = vpow.pop %v582
        %v584 = vmul.f32 %v513, 1.442695
        %v585 = vpow.pop %v584
        %v586 = vmul.f32 %v514, 1.442695
        %v587 = vpow.pop %v586
        %v588 = vmul.f32 %v515, 1.442695
        %v589 = vpow.pop %v588
        %v590 = vmul.f32 %v516, 1.442695
        %v591 = vpow.pop %v590
        %v592 = vmul.f32 %v517, 1.442695
        %v593 = vpow.pop %v592
        %v594 = vmul.f32 %v518, 1.442695
        %v595 = vpow.pop %v594
        %v596 = vmul.f32 %v519, 1.442695
        %v597 = vpow.pop %v596
        %v598 = vmul.f32 %v520, 1.442695
        %v599 = vpow.pop %v598
        %v600 = vmul.f32 %v521, 1.442695
        %v601 = vpow.pop %v600
        %v602 = vmul.f32 %v522, 1.442695
        %v603 = vpow.pop %v602
        %v604 = vmul.f32 %v523, 1.442695
        %v605 = vpow.pop %v604
        %v606 = vmul.f32 %v524, 1.442695
        %v607 = vpow.pop %v606
        %v608 = vmul.f32 %v525, 1.442695
        %v609 = vpow.pop %v608
        %v610 = vmul.f32 %v526, 1.442695
        %v611 = vpow.pop %v610
        %v612 = vmul.f32 %v527, 1.442695
        %v613 = vpow.pop %v612
        %v614 = vmul.f32 %v528, 1.442695
        %v615 = vpow.pop %v614
        %v616 = vmul.f32 %v529, 1.442695
        %v617 = vpow.pop %v616
        %v618 = vmul.f32 %v530, 1.442695
        %v619 = vpow.pop %v618
        %v620 = vmul.f32 %v531, 1.442695
        %v621 = vpow.pop %v620
        %v622 = vmul.f32 %v532, 1.442695
        %v623 = vpow.pop %v622
        %v624 = vmul.f32 %v533, 1.442695
        %v625 = vpow.pop %v624
        %v626 = vmul.f32 %v534, 1.442695
        %v627 = vpow.pop %v626
        %v628 = vmul.f32 %v535, 1.442695
        %v629 = vpow.pop %v628
        %v630 = vmul.f32 %v536, 1.442695
        %v631 = vpow.pop %v630
        %v632 = vmul.f32 %v537, 1.442695
        %v633 = vpow.pop %v632
        %v634 = vmul.f32 %v538, 1.442695
        %v635 = vpow.pop %v634
        %v636 = vmul.f32 %v539, 1.442695
        %v637 = vpow.pop %v636
        %v638 = vmul.f32 %v540, 1.442695
        %v639 = vpow.pop %v638
        %v640 = vmul.f32 %v541, 1.442695
        %v641 = vpow.pop %v640
        %v642 = vmul.f32 %v542, 1.442695
        %v643 = vpow.pop %v642
        %v644 = vmul.f32 %v543, 1.442695
        %v645 = vpow.pop %v644
        %v646 = vmul.f32 %v544, 1.442695
        %v647 = vpow.pop %v646
        %v648 = vmul.f32 %v545, 1.442695
        %v649 = vpow.pop %v648
        %v650 = vmul.f32 %v546, 1.442695
        %v651 = vpow.pop %v650
        %v652 = vmul.f32 %v547, 1.442695
        %v653 = vpow.pop %v652
        %v654 = vmul.f32 %v548, 1.442695
        %v655 = vpow.pop %v654
        %v656 = vmul.f32 %v549, 1.442695
        %v657 = vpow.pop %v656
        %v658 = vmul.f32 %v550, 1.442695
        %v659 = vpow.pop %v658
        %v660 = vmul.f32 %v551, 1.442695
        %v661 = vpow.pop %v660
        %v662 = vmul.f32 %v552, 1.442695
        %v663 = vpow.pop %v662
        %v664 = vmul.f32 %v553, 1.442695
        %v665 = vpow.pop %v664
        %v666 = vmul.f32 %v554, 1.442695
        %v667 = vpow.pop %v666
        %v668 = vmul.f32 %v555, 1.442695
        %v669 = vpow.pop %v668
        %v670 = vmul.f32 %v556, 1.442695
        %v671 = vpow.pop %v670
        %v672 = vmul.f32 %v557, 1.442695
        %v673 = vpow.pop %v672
        %v674 = vmul.f32 %v558, 1.442695
        %v675 = vpow.pop %v674
        %v676 = vmul.f32 %v559, 1.442695
        %v677 = vpow.pop %v676
        %v678 = vmul.f32 %v560, 1.442695
        %v679 = vpow.pop %v678
        %v680 = vmul.f32 %v561, 1.442695
        %v681 = vpow.pop %v680
        %v682 = vmul.f32 %v562, 1.442695
        %v683 = vpow.pop %v682
        %v684 = vmul.f32 %v563, 1.442695
        %v685 = vpow.pop %v684
        %v686 = vmul.f32 %v564, 1.442695
        %v687 = vpow.pop %v686
        %v688 = vmul.f32 %v565, 1.442695
        %v689 = vpow.pop %v688
        %v690 = vmul.f32 %v566, 1.442695
        %v691 = vpow.pop %v690
        %v692 = vmul.f32 %v567, 1.442695
        %v693 = vpow.pop %v692
        %v694 = vmul.f32 %v568, 1.442695
        %v695 = vpow.pop %v694
        %v696 = vmul.f32 %v569, 1.442695
        %v697 = vpow.pop %v696
        %v698 = vadd.f32 %v571, 1.0
        %v699 = vadd.f32 %v573, 1.0
        %v700 = vadd.f32 %v575, 1.0
        %v701 = vadd.f32 %v577, 1.0
        %v702 = vadd.f32 %v579, 1.0
        %v703 = vadd.f32 %v581, 1.0
        %v704 = vadd.f32 %v583, 1.0
        %v705 = vadd.f32 %v585, 1.0
        %v706 = vadd.f32 %v587, 1.0
        %v707 = vadd.f32 %v589, 1.0
        %v708 = vadd.f32 %v591, 1.0
        %v709 = vadd.f32 %v593, 1.0
        %v710 = vadd.f32 %v595, 1.0
        %v711 = vadd.f32 %v597, 1.0
        %v712 = vadd.f32 %v599, 1.0
        %v713 = vadd.f32 %v601, 1.0
        %v714 = vadd.f32 %v603, 1.0
        %v715 = vadd.f32 %v605, 1.0
        %v716 = vadd.f32 %v607, 1.0
        %v717 = vadd.f32 %v609, 1.0
        %v718 = vadd.f32 %v611, 1.0
        %v719 = vadd.f32 %v613, 1.0
        %v720 = vadd.f32 %v615, 1.0
        %v721 = vadd.f32 %v617, 1.0
        %v722 = vadd.f32 %v619, 1.0
        %v723 = vadd.f32 %v621, 1.0
        %v724 = vadd.f32 %v623, 1.0
        %v725 = vadd.f32 %v625, 1.0
        %v726 = vadd.f32 %v627, 1.0
        %v727 = vadd.f32 %v629, 1.0
        %v728 = vadd.f32 %v631, 1.0
        %v729 = vadd.f32 %v633, 1.0
        %v730 = vadd.f32 %v635, 1.0
        %v731 = vadd.f32 %v637, 1.0
        %v732 = vadd.f32 %v639, 1.0
        %v733 = vadd.f32 %v641, 1.0
        %v734 = vadd.f32 %v643, 1.0
        %v735 = vadd.f32 %v645, 1.0
        %v736 = vadd.f32 %v647, 1.0
        %v737 = vadd.f32 %v649, 1.0
        %v738 = vadd.f32 %v651, 1.0
        %v739 = vadd.f32 %v653, 1.0
        %v740 = vadd.f32 %v655, 1.0
        %v741 = vadd.f32 %v657, 1.0
        %v742 = vadd.f32 %v659, 1.0
        %v743 = vadd.f32 %v661, 1.0
        %v744 = vadd.f32 %v663, 1.0
        %v745 = vadd.f32 %v665, 1.0
        %v746 = vadd.f32 %v667, 1.0
        %v747 = vadd.f32 %v669, 1.0
        %v748 = vadd.f32 %v671, 1.0
        %v749 = vadd.f32 %v673, 1.0
        %v750 = vadd.f32 %v675, 1.0
        %v751 = vadd.f32 %v677, 1.0
        %v752 = vadd.f32 %v679, 1.0
        %v753 = vadd.f32 %v681, 1.0
        %v754 = vadd.f32 %v683, 1.0
        %v755 = vadd.f32 %v685, 1.0
        %v756 = vadd.f32 %v687, 1.0
        %v757 = vadd.f32 %v689, 1.0
        %v758 = vadd.f32 %v691, 1.0
        %v759 = vadd.f32 %v693, 1.0
        %v760 = vadd.f32 %v695, 1.0
        %v761 = vadd.f32 %v697, 1.0
        %v762 = vrcp.pop %v698
        %v763 = vmul.f32 1.0, %v762
        %v764 = vrcp.pop %v699
        %v765 = vmul.f32 1.0, %v764
        %v766 = vrcp.pop %v700
        %v767 = vmul.f32 1.0, %v766
        %v768 = vrcp.pop %v701
        %v769 = vmul.f32 1.0, %v768
        %v770 = vrcp.pop %v702
        %v771 = vmul.f32 1.0, %v770
        %v772 = vrcp.pop %v703
        %v773 = vmul.f32 1.0, %v772
        %v774 = vrcp.pop %v704
        %v775 = vmul.f32 1.0, %v774
        %v776 = vrcp.pop %v705
        %v777 = vmul.f32 1.0, %v776
        %v778 = vrcp.pop %v706
        %v779 = vmul.f32 1.0, %v778
        %v780 = vrcp.pop %v707
        %v781 = vmul.f32 1.0, %v780
        %v782 = vrcp.pop %v708
        %v783 = vmul.f32 1.0, %v782
        %v784 = vrcp.pop %v709
        %v785 = vmul.f32 1.0, %v784
        %v786 = vrcp.pop %v710
        %v787 = vmul.f32 1.0, %v786
        %v788 = vrcp.pop %v711
        %v789 = vmul.f32 1.0, %v788
        %v790 = vrcp.pop %v712
        %v791 = vmul.f32 1.0, %v790
        %v792 = vrcp.pop %v713
        %v793 = vmul.f32 1.0, %v792
        %v794 = vrcp.pop %v714
        %v795 = vmul.f32 1.0, %v794
        %v796 = vrcp.pop %v715
        %v797 = vmul.f32 1.0, %v796
        %v798 = vrcp.pop %v716
        %v799 = vmul.f32 1.0, %v798
        %v800 = vrcp.pop %v717
        %v801 = vmul.f32 1.0, %v800
        %v802 = vrcp.pop %v718
        %v803 = vmul.f32 1.0, %v802
        %v804 = vrcp.pop %v719
        %v805 = vmul.f32 1.0, %v804
        %v806 = vrcp.pop %v720
        %v807 = vmul.f32 1.0, %v806
        %v808 = vrcp.pop %v721
        %v809 = vmul.f32 1.0, %v808
        %v810 = vrcp.pop %v722
        %v811 = vmul.f32 1.0, %v810
        %v812 = vrcp.pop %v723
        %v813 = vmul.f32 1.0, %v812
        %v814 = vrcp.pop %v724
        %v815 = vmul.f32 1.0, %v814
        %v816 = vrcp.pop %v725
        %v817 = vmul.f32 1.0, %v816
        %v818 = vrcp.pop %v726
        %v819 = vmul.f32 1.0, %v818
        %v820 = vrcp.pop %v727
        %v821 = vmul.f32 1.0, %v820
        %v822 = vrcp.pop %v728
        %v823 = vmul.f32 1.0, %v822
        %v824 = vrcp.pop %v729
        %v825 = vmul.f32 1.0, %v824
        %v826 = vrcp.pop %v730
        %v827 = vmul.f32 1.0, %v826
        %v828 = vrcp.pop %v731
        %v829 = vmul.f32 1.0, %v828
        %v830 = vrcp.pop %v732
        %v831 = vmul.f32 1.0, %v830
        %v832 = vrcp.pop %v733
        %v833 = vmul.f32 1.0, %v832
        %v834 = vrcp.pop %v734
        %v835 = vmul.f32 1.0, %v834
        %v836 = vrcp.pop %v735
        %v837 = vmul.f32 1.0, %v836
        %v838 = vrcp.pop %v736
        %v839 = vmul.f32 1.0, %v838
        %v840 = vrcp.pop %v737
        %v841 = vmul.f32 1.0, %v840
        %v842 = vrcp.pop %v738
        %v843 = vmul.f32 1.0, %v842
        %v844 = vrcp.pop %v739
        %v845 = vmul.f32 1.0, %v844
        %v846 = vrcp.pop %v740
        %v847 = vmul.f32 1.0, %v846
        %v848 = vrcp.pop %v741
        %v849 = vmul.f32 1.0, %v848
        %v850 = vrcp.pop %v742
        %v851 = vmul.f32 1.0, %v850
        %v852 = vrcp.pop %v743
        %v853 = vmul.f32 1.0, %v852
        %v854 = vrcp.pop %v744
        %v855 = vmul.f32 1.0, %v854
        %v856 = vrcp.pop %v745
        %v857 = vmul.f32 1.0, %v856
        %v858 = vrcp.pop %v746
        %v859 = vmul.f32 1.0, %v858
        %v860 = vrcp.pop %v747
        %v861 = vmul.f32 1.0, %v860
        %v862 = vrcp.pop %v748
        %v863 = vmul.f32 1.0, %v862
        %v864 = vrcp.pop %v749
        %v865 = vmul.f32 1.0, %v864
        %v866 = vrcp.pop %v750
        %v867 = vmul.f32 1.0, %v866
        %v868 = vrcp.pop %v751
        %v869 = vmul.f32 1.0, %v868
        %v870 = vrcp.pop %v752
        %v871 = vmul.f32 1.0, %v870
        %v872 = vrcp.pop %v753
        %v873 = vmul.f32 1.0, %v872
        %v874 = vrcp.pop %v754
        %v875 = vmul.f32 1.0, %v874
        %v876 = vrcp.pop %v755
        %v877 = vmul.f32 1.0, %v876
        %v878 = vrcp.pop %v756
        %v879 = vmul.f32 1.0, %v878
        %v880 = vrcp.pop %v757
        %v881 = vmul.f32 1.0, %v880
        %v882 = vrcp.pop %v758
        %v883 = vmul.f32 1.0, %v882
        %v884 = vrcp.pop %v759
        %v885 = vmul.f32 1.0, %v884
        %v886 = vrcp.pop %v760
        %v887 = vmul.f32 1.0, %v886
        %v888 = vrcp.pop %v761
        %v889 = vmul.f32 1.0, %v888
        %v890 = vmul.f32 %v442, %v763
        %v891 = vmul.f32 %v443, %v765
        %v892 = vmul.f32 %v444, %v767
        %v893 = vmul.f32 %v445, %v769
        %v894 = vmul.f32 %v446, %v771
        %v895 = vmul.f32 %v447, %v773
        %v896 = vmul.f32 %v448, %v775
        %v897 = vmul.f32 %v449, %v777
        %v898 = vmul.f32 %v450, %v779
        %v899 = vmul.f32 %v451, %v781
        %v900 = vmul.f32 %v452, %v783
        %v901 = vmul.f32 %v453, %v785
        %v902 = vmul.f32 %v454, %v787
        %v903 = vmul.f32 %v455, %v789
        %v904 = vmul.f32 %v456, %v791
        %v905 = vmul.f32 %v457, %v793
        %v906 = vmul.f32 %v458, %v795
        %v907 = vmul.f32 %v459, %v797
        %v908 = vmul.f32 %v460, %v799
        %v909 = vmul.f32 %v461, %v801
        %v910 = vmul.f32 %v462, %v803
        %v911 = vmul.f32 %v463, %v805
        %v912 = vmul.f32 %v464, %v807
        %v913 = vmul.f32 %v465, %v809
        %v914 = vmul.f32 %v466, %v811
        %v915 = vmul.f32 %v467, %v813
        %v916 = vmul.f32 %v468, %v815
        %v917 = vmul.f32 %v469, %v817
        %v918 = vmul.f32 %v470, %v819
        %v919 = vmul.f32 %v471, %v821
        %v920 = vmul.f32 %v472, %v823
        %v921 = vmul.f32 %v473, %v825
        %v922 = vmul.f32 %v474, %v827
        %v923 = vmul.f32 %v475, %v829
        %v924 = vmul.f32 %v476, %v831
        %v925 = vmul.f32 %v477, %v833
        %v926 = vmul.f32 %v478, %v835
        %v927 = vmul.f32 %v479, %v837
        %v928 = vmul.f32 %v480, %v839
        %v929 = vmul.f32 %v481, %v841
        %v930 = vmul.f32 %v482, %v843
        %v931 = vmul.f32 %v483, %v845
        %v932 = vmul.f32 %v484, %v847
        %v933 = vmul.f32 %v485, %v849
        %v934 = vmul.f32 %v486, %v851
        %v935 = vmul.f32 %v487, %v853
        %v936 = vmul.f32 %v488, %v855
        %v937 = vmul.f32 %v489, %v857
        %v938 = vmul.f32 %v490, %v859
        %v939 = vmul.f32 %v491, %v861
        %v940 = vmul.f32 %v492, %v863
        %v941 = vmul.f32 %v493, %v865
        %v942 = vmul.f32 %v494, %v867
        %v943 = vmul.f32 %v495, %v869
        %v944 = vmul.f32 %v496, %v871
        %v945 = vmul.f32 %v497, %v873
        %v946 = vmul.f32 %v498, %v875
        %v947 = vmul.f32 %v499, %v877
        %v948 = vmul.f32 %v500, %v879
        %v949 = vmul.f32 %v501, %v881
        %v950 = vmul.f32 %v502, %v883
        %v951 = vmul.f32 %v503, %v885
        %v952 = vmul.f32 %v504, %v887
        %v953 = vmul.f32 %v505, %v889
        %v954 = vpack.c.bf16 %v898, %v890
        %v955 = vpack.c.bf16 %v899, %v891
        %v956 = vpack.c.bf16 %v900, %v892
        %v957 = vpack.c.bf16 %v901, %v893
        %v958 = vpack.c.bf16 %v902, %v894
        %v959 = vpack.c.bf16 %v903, %v895
        %v960 = vpack.c.bf16 %v904, %v896
        %v961 = vpack.c.bf16 %v905, %v897
        %v962 = vpack.c.bf16 %v914, %v906
        %v963 = vpack.c.bf16 %v915, %v907
        %v964 = vpack.c.bf16 %v916, %v908
        %v965 = vpack.c.bf16 %v917, %v909
        %v966 = vpack.c.bf16 %v918, %v910
        %v967 = vpack.c.bf16 %v919, %v911
        %v968 = vpack.c.bf16 %v920, %v912
        %v969 = vpack.c.bf16 %v921, %v913
        %v970 = vpack.c.bf16 %v930, %v922
        %v971 = vpack.c.bf16 %v931, %v923
        %v972 = vpack.c.bf16 %v932, %v924
        %v973 = vpack.c.bf16 %v933, %v925
        %v974 = vpack.c.bf16 %v934, %v926
        %v975 = vpack.c.bf16 %v935, %v927
        %v976 = vpack.c.bf16 %v936, %v928
        %v977 = vpack.c.bf16 %v937, %v929
        %v978 = vpack.c.bf16 %v946, %v938
        %v979 = vpack.c.bf16 %v947, %v939
        %v980 = vpack.c.bf16 %v948, %v940
        %v981 = vpack.c.bf16 %v949, %v941
        %v982 = vpack.c.bf16 %v950, %v942
        %v983 = vpack.c.bf16 %v951, %v943
        %v984 = vpack.c.bf16 %v952, %v944
        %v985 = vpack.c.bf16 %v953, %v945
        %v986 = vld [vmem:[%s3] sm:$0xf]
        %v987 = vld [vmem:[%s3 + $0x4] sm:$0xf]
        %v988 = vld [vmem:[%s3 + $0x8] sm:$0xf]
        %v989 = vld [vmem:[%s3 + $0xc] sm:$0xf]
        %v990 = vld [vmem:[%s3 + $0x10] sm:$0xf]
        %v991 = vld [vmem:[%s3 + $0x14] sm:$0xf]
        %v992 = vld [vmem:[%s3 + $0x18] sm:$0xf]
        %v993 = vld [vmem:[%s3 + $0x1c] sm:$0xf]
        %v994 = vld [vmem:[%s3 + $0x20] sm:$0xf]
        %v995 = vld [vmem:[%s3 + $0x24] sm:$0xf]
        %v996 = vld [vmem:[%s3 + $0x28] sm:$0xf]
        %v997 = vld [vmem:[%s3 + $0x2c] sm:$0xf]
        %v998 = vld [vmem:[%s3 + $0x30] sm:$0xf]
        %v999 = vld [vmem:[%s3 + $0x34] sm:$0xf]
        %v1000 = vld [vmem:[%s3 + $0x38] sm:$0xf]
        %v1001 = vld [vmem:[%s3 + $0x3c] sm:$0xf]
        %v1002 = vld [vmem:[%s3 + $0x40] sm:$0xf]
        %v1003 = vld [vmem:[%s3 + $0x44] sm:$0xf]
        %v1004 = vld [vmem:[%s3 + $0x48] sm:$0xf]
        %v1005 = vld [vmem:[%s3 + $0x4c] sm:$0xf]
        %v1006 = vld [vmem:[%s3 + $0x50] sm:$0xf]
        %v1007 = vld [vmem:[%s3 + $0x54] sm:$0xf]
        %v1008 = vld [vmem:[%s3 + $0x58] sm:$0xf]
        %v1009 = vld [vmem:[%s3 + $0x5c] sm:$0xf]
        %v1010 = vld [vmem:[%s3 + $0x60] sm:$0xf]
        %v1011 = vld [vmem:[%s3 + $0x64] sm:$0xf]
        %v1012 = vld [vmem:[%s3 + $0x68] sm:$0xf]
        %v1013 = vld [vmem:[%s3 + $0x6c] sm:$0xf]
        %v1014 = vld [vmem:[%s3 + $0x70] sm:$0xf]
        %v1015 = vld [vmem:[%s3 + $0x74] sm:$0xf]
        %v1016 = vld [vmem:[%s3 + $0x78] sm:$0xf]
        %v1017 = vld [vmem:[%s3 + $0x7c] sm:$0xf]
        %v1018 = vld [vmem:[%s3 + $0x80] sm:$0xf]
        %v1019 = vld [vmem:[%s3 + $0x84] sm:$0xf]
        %v1020 = vld [vmem:[%s3 + $0x88] sm:$0xf]
        %v1021 = vld [vmem:[%s3 + $0x8c] sm:$0xf]
        %v1022 = vld [vmem:[%s3 + $0x90] sm:$0xf]
        %v1023 = vld [vmem:[%s3 + $0x94] sm:$0xf]
        %v1024 = vld [vmem:[%s3 + $0x98] sm:$0xf]
        %v1025 = vld [vmem:[%s3 + $0x9c] sm:$0xf]
        %v1026 = vld [vmem:[%s3 + $0xa0] sm:$0xf]
        %v1027 = vld [vmem:[%s3 + $0xa4] sm:$0xf]
        %v1028 = vld [vmem:[%s3 + $0xa8] sm:$0xf]
        %v1029 = vld [vmem:[%s3 + $0xac] sm:$0xf]
        %v1030 = vld [vmem:[%s3 + $0xb0] sm:$0xf]
        %v1031 = vld [vmem:[%s3 + $0xb4] sm:$0xf]
        %v1032 = vld [vmem:[%s3 + $0xb8] sm:$0xf]
        %v1033 = vld [vmem:[%s3 + $0xbc] sm:$0xf]
        %v1034 = vld [vmem:[%s3 + $0xc0] sm:$0xf]
        %v1035 = vld [vmem:[%s3 + $0xc4] sm:$0xf]
        %v1036 = vld [vmem:[%s3 + $0xc8] sm:$0xf]
        %v1037 = vld [vmem:[%s3 + $0xcc] sm:$0xf]
        %v1038 = vld [vmem:[%s3 + $0xd0] sm:$0xf]
        %v1039 = vld [vmem:[%s3 + $0xd4] sm:$0xf]
        %v1040 = vld [vmem:[%s3 + $0xd8] sm:$0xf]
        %v1041 = vld [vmem:[%s3 + $0xdc] sm:$0xf]
        %v1042 = vld [vmem:[%s3 + $0xe0] sm:$0xf]
        %v1043 = vld [vmem:[%s3 + $0xe4] sm:$0xf]
        %v1044 = vld [vmem:[%s3 + $0xe8] sm:$0xf]
        %v1045 = vld [vmem:[%s3 + $0xec] sm:$0xf]
        %v1046 = vld [vmem:[%s3 + $0xf0] sm:$0xf]
        %v1047 = vld [vmem:[%s3 + $0xf4] sm:$0xf]
        %v1048 = vld [vmem:[%s3 + $0xf8] sm:$0xf]
        %v1049 = vld [vmem:[%s3 + $0xfc] sm:$0xf]
        %v1050 = vld [vmem:[%s3 + $0x100] sm:$0xf]
        %v1051 = vld [vmem:[%s3 + $0x104] sm:$0xf]
        %v1052 = vld [vmem:[%s3 + $0x108] sm:$0xf]
        %v1053 = vld [vmem:[%s3 + $0x10c] sm:$0xf]
        %v1054 = vld [vmem:[%s3 + $0x110] sm:$0xf]
        %v1055 = vld [vmem:[%s3 + $0x114] sm:$0xf]
        %v1056 = vld [vmem:[%s3 + $0x118] sm:$0xf]
        %v1057 = vld [vmem:[%s3 + $0x11c] sm:$0xf]
        %v1058 = vld [vmem:[%s3 + $0x120] sm:$0xf]
        %v1059 = vld [vmem:[%s3 + $0x124] sm:$0xf]
        %v1060 = vld [vmem:[%s3 + $0x128] sm:$0xf]
        %v1061 = vld [vmem:[%s3 + $0x12c] sm:$0xf]
        %v1062 = vld [vmem:[%s3 + $0x130] sm:$0xf]
        %v1063 = vld [vmem:[%s3 + $0x134] sm:$0xf]
        %v1064 = vld [vmem:[%s3 + $0x138] sm:$0xf]
        %v1065 = vld [vmem:[%s3 + $0x13c] sm:$0xf]
        %v1066 = vld [vmem:[%s3 + $0x140] sm:$0xf]
        %v1067 = vld [vmem:[%s3 + $0x144] sm:$0xf]
        %v1068 = vld [vmem:[%s3 + $0x148] sm:$0xf]
        %v1069 = vld [vmem:[%s3 + $0x14c] sm:$0xf]
        %v1070 = vld [vmem:[%s3 + $0x150] sm:$0xf]
        %v1071 = vld [vmem:[%s3 + $0x154] sm:$0xf]
        %v1072 = vld [vmem:[%s3 + $0x158] sm:$0xf]
        %v1073 = vld [vmem:[%s3 + $0x15c] sm:$0xf]
        %v1074 = vld [vmem:[%s3 + $0x160] sm:$0xf]
        %v1075 = vld [vmem:[%s3 + $0x164] sm:$0xf]
        %v1076 = vld [vmem:[%s3 + $0x168] sm:$0xf]
        %v1077 = vld [vmem:[%s3 + $0x16c] sm:$0xf]
        %v1078 = vld [vmem:[%s3 + $0x170] sm:$0xf]
        %v1079 = vld [vmem:[%s3 + $0x174] sm:$0xf]
        %v1080 = vld [vmem:[%s3 + $0x178] sm:$0xf]
        %v1081 = vld [vmem:[%s3 + $0x17c] sm:$0xf]
        %v1082 = vld [vmem:[%s3 + $0x180] sm:$0xf]
        %v1083 = vld [vmem:[%s3 + $0x184] sm:$0xf]
        %v1084 = vld [vmem:[%s3 + $0x188] sm:$0xf]
        %v1085 = vld [vmem:[%s3 + $0x18c] sm:$0xf]
        %v1086 = vld [vmem:[%s3 + $0x190] sm:$0xf]
        %v1087 = vld [vmem:[%s3 + $0x194] sm:$0xf]
        %v1088 = vld [vmem:[%s3 + $0x198] sm:$0xf]
        %v1089 = vld [vmem:[%s3 + $0x19c] sm:$0xf]
        %v1090 = vld [vmem:[%s3 + $0x1a0] sm:$0xf]
        %v1091 = vld [vmem:[%s3 + $0x1a4] sm:$0xf]
        %v1092 = vld [vmem:[%s3 + $0x1a8] sm:$0xf]
        %v1093 = vld [vmem:[%s3 + $0x1ac] sm:$0xf]
        %v1094 = vld [vmem:[%s3 + $0x1b0] sm:$0xf]
        %v1095 = vld [vmem:[%s3 + $0x1b4] sm:$0xf]
        %v1096 = vld [vmem:[%s3 + $0x1b8] sm:$0xf]
        %v1097 = vld [vmem:[%s3 + $0x1bc] sm:$0xf]
        %v1098 = vld [vmem:[%s3 + $0x1c0] sm:$0xf]
        %v1099 = vld [vmem:[%s3 + $0x1c4] sm:$0xf]
        %v1100 = vld [vmem:[%s3 + $0x1c8] sm:$0xf]
        %v1101 = vld [vmem:[%s3 + $0x1cc] sm:$0xf]
        %v1102 = vld [vmem:[%s3 + $0x1d0] sm:$0xf]
        %v1103 = vld [vmem:[%s3 + $0x1d4] sm:$0xf]
        %v1104 = vld [vmem:[%s3 + $0x1d8] sm:$0xf]
        %v1105 = vld [vmem:[%s3 + $0x1dc] sm:$0xf]
        %v1106 = vld [vmem:[%s3 + $0x1e0] sm:$0xf]
        %v1107 = vld [vmem:[%s3 + $0x1e4] sm:$0xf]
        %v1108 = vld [vmem:[%s3 + $0x1e8] sm:$0xf]
        %v1109 = vld [vmem:[%s3 + $0x1ec] sm:$0xf]
        %v1110 = vld [vmem:[%s3 + $0x1f0] sm:$0xf]
        %v1111 = vld [vmem:[%s3 + $0x1f4] sm:$0xf]
        %v1112 = vld [vmem:[%s3 + $0x1f8] sm:$0xf]
        %v1113 = vld [vmem:[%s3 + $0x1fc] sm:$0xf]
        %v1242 = vunpack.c.l.b16 %v986
        %v1243 = vunpack.c.l.b16 %v987
        %v1244 = vunpack.c.l.b16 %v988
        %v1245 = vunpack.c.l.b16 %v989
        %v1246 = vunpack.c.l.b16 %v990
        %v1247 = vunpack.c.l.b16 %v991
        %v1248 = vunpack.c.l.b16 %v992
        %v1249 = vunpack.c.l.b16 %v993
        %v1250 = vunpack.c.l.b16 %v994
        %v1251 = vunpack.c.l.b16 %v995
        %v1252 = vunpack.c.l.b16 %v996
        %v1253 = vunpack.c.l.b16 %v997
        %v1254 = vunpack.c.l.b16 %v998
        %v1255 = vunpack.c.l.b16 %v999
        %v1256 = vunpack.c.l.b16 %v1000
        %v1257 = vunpack.c.l.b16 %v1001
        %v1258 = vunpack.c.l.b16 %v1002
        %v1259 = vunpack.c.l.b16 %v1003
        %v1260 = vunpack.c.l.b16 %v1004
        %v1261 = vunpack.c.l.b16 %v1005
        %v1262 = vunpack.c.l.b16 %v1006
        %v1263 = vunpack.c.l.b16 %v1007
        %v1264 = vunpack.c.l.b16 %v1008
        %v1265 = vunpack.c.l.b16 %v1009
        %v1266 = vunpack.c.l.b16 %v1010
        %v1267 = vunpack.c.l.b16 %v1011
        %v1268 = vunpack.c.l.b16 %v1012
        %v1269 = vunpack.c.l.b16 %v1013
        %v1270 = vunpack.c.l.b16 %v1014
        %v1271 = vunpack.c.l.b16 %v1015
        %v1272 = vunpack.c.l.b16 %v1016
        %v1273 = vunpack.c.l.b16 %v1017
        %v1274 = vunpack.c.l.b16 %v1018
        %v1275 = vunpack.c.l.b16 %v1019
        %v1276 = vunpack.c.l.b16 %v1020
        %v1277 = vunpack.c.l.b16 %v1021
        %v1278 = vunpack.c.l.b16 %v1022
        %v1279 = vunpack.c.l.b16 %v1023
        %v1280 = vunpack.c.l.b16 %v1024
        %v1281 = vunpack.c.l.b16 %v1025
        %v1282 = vunpack.c.l.b16 %v1026
        %v1283 = vunpack.c.l.b16 %v1027
        %v1284 = vunpack.c.l.b16 %v1028
        %v1285 = vunpack.c.l.b16 %v1029
        %v1286 = vunpack.c.l.b16 %v1030
        %v1287 = vunpack.c.l.b16 %v1031
        %v1288 = vunpack.c.l.b16 %v1032
        %v1289 = vunpack.c.l.b16 %v1033
        %v1290 = vunpack.c.l.b16 %v1034
        %v1291 = vunpack.c.l.b16 %v1035
        %v1292 = vunpack.c.l.b16 %v1036
        %v1293 = vunpack.c.l.b16 %v1037
        %v1294 = vunpack.c.l.b16 %v1038
        %v1295 = vunpack.c.l.b16 %v1039
        %v1296 = vunpack.c.l.b16 %v1040
        %v1297 = vunpack.c.l.b16 %v1041
        %v1298 = vunpack.c.l.b16 %v1042
        %v1299 = vunpack.c.l.b16 %v1043
        %v1300 = vunpack.c.l.b16 %v1044
        %v1301 = vunpack.c.l.b16 %v1045
        %v1302 = vunpack.c.l.b16 %v1046
        %v1303 = vunpack.c.l.b16 %v1047
        %v1304 = vunpack.c.l.b16 %v1048
        %v1305 = vunpack.c.l.b16 %v1049
        %v1306 = vunpack.c.l.b16 %v1050
        %v1307 = vunpack.c.l.b16 %v1051
        %v1308 = vunpack.c.l.b16 %v1052
        %v1309 = vunpack.c.l.b16 %v1053
        %v1310 = vunpack.c.l.b16 %v1054
        %v1311 = vunpack.c.l.b16 %v1055
        %v1312 = vunpack.c.l.b16 %v1056
        %v1313 = vunpack.c.l.b16 %v1057
        %v1314 = vunpack.c.l.b16 %v1058
        %v1315 = vunpack.c.l.b16 %v1059
        %v1316 = vunpack.c.l.b16 %v1060
        %v1317 = vunpack.c.l.b16 %v1061
        %v1318 = vunpack.c.l.b16 %v1062
        %v1319 = vunpack.c.l.b16 %v1063
        %v1320 = vunpack.c.l.b16 %v1064
        %v1321 = vunpack.c.l.b16 %v1065
        %v1322 = vunpack.c.l.b16 %v1066
        %v1323 = vunpack.c.l.b16 %v1067
        %v1324 = vunpack.c.l.b16 %v1068
        %v1325 = vunpack.c.l.b16 %v1069
        %v1326 = vunpack.c.l.b16 %v1070
        %v1327 = vunpack.c.l.b16 %v1071
        %v1328 = vunpack.c.l.b16 %v1072
        %v1329 = vunpack.c.l.b16 %v1073
        %v1330 = vunpack.c.l.b16 %v1074
        %v1331 = vunpack.c.l.b16 %v1075
        %v1332 = vunpack.c.l.b16 %v1076
        %v1333 = vunpack.c.l.b16 %v1077
        %v1334 = vunpack.c.l.b16 %v1078
        %v1335 = vunpack.c.l.b16 %v1079
        %v1336 = vunpack.c.l.b16 %v1080
        %v1337 = vunpack.c.l.b16 %v1081
        %v1338 = vunpack.c.l.b16 %v1082
        %v1339 = vunpack.c.l.b16 %v1083
        %v1340 = vunpack.c.l.b16 %v1084
        %v1341 = vunpack.c.l.b16 %v1085
        %v1342 = vunpack.c.l.b16 %v1086
        %v1343 = vunpack.c.l.b16 %v1087
        %v1344 = vunpack.c.l.b16 %v1088
        %v1345 = vunpack.c.l.b16 %v1089
        %v1346 = vunpack.c.l.b16 %v1090
        %v1347 = vunpack.c.l.b16 %v1091
        %v1348 = vunpack.c.l.b16 %v1092
        %v1349 = vunpack.c.l.b16 %v1093
        %v1350 = vunpack.c.l.b16 %v1094
        %v1351 = vunpack.c.l.b16 %v1095
        %v1352 = vunpack.c.l.b16 %v1096
        %v1353 = vunpack.c.l.b16 %v1097
        %v1354 = vunpack.c.l.b16 %v1098
        %v1355 = vunpack.c.l.b16 %v1099
        %v1356 = vunpack.c.l.b16 %v1100
        %v1357 = vunpack.c.l.b16 %v1101
        %v1358 = vunpack.c.l.b16 %v1102
        %v1359 = vunpack.c.l.b16 %v1103
        %v1360 = vunpack.c.l.b16 %v1104
        %v1361 = vunpack.c.l.b16 %v1105
        %v1362 = vunpack.c.l.b16 %v1106
        %v1363 = vunpack.c.l.b16 %v1107
        %v1364 = vunpack.c.l.b16 %v1108
        %v1365 = vunpack.c.l.b16 %v1109
        %v1366 = vunpack.c.l.b16 %v1110
        %v1367 = vunpack.c.l.b16 %v1111
        %v1368 = vunpack.c.l.b16 %v1112
        %v1369 = vunpack.c.l.b16 %v1113
        %v1370 = vpack.c.b16 %v1243, %v1242
        %v1371 = vpack.c.b16 %v1245, %v1244
        %v1372 = vpack.c.b16 %v1247, %v1246
        %v1373 = vpack.c.b16 %v1249, %v1248
        %v1374 = vpack.c.b16 %v1251, %v1250
        %v1375 = vpack.c.b16 %v1253, %v1252
        %v1376 = vpack.c.b16 %v1255, %v1254
        %v1377 = vpack.c.b16 %v1257, %v1256
        %v1378 = vpack.c.b16 %v1259, %v1258
        %v1379 = vpack.c.b16 %v1261, %v1260
        %v1380 = vpack.c.b16 %v1263, %v1262
        %v1381 = vpack.c.b16 %v1265, %v1264
        %v1382 = vpack.c.b16 %v1267, %v1266
        %v1383 = vpack.c.b16 %v1269, %v1268
        %v1384 = vpack.c.b16 %v1271, %v1270
        %v1385 = vpack.c.b16 %v1273, %v1272
        %v1386 = vpack.c.b16 %v1275, %v1274
        %v1387 = vpack.c.b16 %v1277, %v1276
        %v1388 = vpack.c.b16 %v1279, %v1278
        %v1389 = vpack.c.b16 %v1281, %v1280
        %v1390 = vpack.c.b16 %v1283, %v1282
        %v1391 = vpack.c.b16 %v1285, %v1284
        %v1392 = vpack.c.b16 %v1287, %v1286
        %v1393 = vpack.c.b16 %v1289, %v1288
        %v1394 = vpack.c.b16 %v1291, %v1290
        %v1395 = vpack.c.b16 %v1293, %v1292
        %v1396 = vpack.c.b16 %v1295, %v1294
        %v1397 = vpack.c.b16 %v1297, %v1296
        %v1398 = vpack.c.b16 %v1299, %v1298
        %v1399 = vpack.c.b16 %v1301, %v1300
        %v1400 = vpack.c.b16 %v1303, %v1302
        %v1401 = vpack.c.b16 %v1305, %v1304
        %v1402 = vpack.c.b16 %v1307, %v1306
        %v1403 = vpack.c.b16 %v1309, %v1308
        %v1404 = vpack.c.b16 %v1311, %v1310
        %v1405 = vpack.c.b16 %v1313, %v1312
        %v1406 = vpack.c.b16 %v1315, %v1314
        %v1407 = vpack.c.b16 %v1317, %v1316
        %v1408 = vpack.c.b16 %v1319, %v1318
        %v1409 = vpack.c.b16 %v1321, %v1320
        %v1410 = vpack.c.b16 %v1323, %v1322
        %v1411 = vpack.c.b16 %v1325, %v1324
        %v1412 = vpack.c.b16 %v1327, %v1326
        %v1413 = vpack.c.b16 %v1329, %v1328
        %v1414 = vpack.c.b16 %v1331, %v1330
        %v1415 = vpack.c.b16 %v1333, %v1332
        %v1416 = vpack.c.b16 %v1335, %v1334
        %v1417 = vpack.c.b16 %v1337, %v1336
        %v1418 = vpack.c.b16 %v1339, %v1338
        %v1419 = vpack.c.b16 %v1341, %v1340
        %v1420 = vpack.c.b16 %v1343, %v1342
        %v1421 = vpack.c.b16 %v1345, %v1344
        %v1422 = vpack.c.b16 %v1347, %v1346
        %v1423 = vpack.c.b16 %v1349, %v1348
        %v1424 = vpack.c.b16 %v1351, %v1350
        %v1425 = vpack.c.b16 %v1353, %v1352
        %v1426 = vpack.c.b16 %v1355, %v1354
        %v1427 = vpack.c.b16 %v1357, %v1356
        %v1428 = vpack.c.b16 %v1359, %v1358
        %v1429 = vpack.c.b16 %v1361, %v1360
        %v1430 = vpack.c.b16 %v1363, %v1362
        %v1431 = vpack.c.b16 %v1365, %v1364
        %v1432 = vpack.c.b16 %v1367, %v1366
        %v1433 = vpack.c.b16 %v1369, %v1368
        %1498 = vmatprep.subr.bf16.mxu0 0
        %1499 = vmatpush1.bf16.msra.mxu0 %v1370
        %1500 = vmatprep.subr.bf16.mxu0 0
        %1501 = vmatpush1.bf16.msra.mxu0 %v1371
        %1502 = vmatprep.subr.bf16.mxu0 0
        %1503 = vmatpush1.bf16.msra.mxu0 %v1372
        %1504 = vmatprep.subr.bf16.mxu0 0
        %1505 = vmatpush1.bf16.msra.mxu0 %v1373
        %1506 = vmatprep.subr.bf16.mxu0 0
        %1507 = vmatpush1.bf16.msra.mxu0 %v1374
        %1508 = vmatprep.subr.bf16.mxu0 0
        %1509 = vmatpush1.bf16.msra.mxu0 %v1375
        %1510 = vmatprep.subr.bf16.mxu0 0
        %1511 = vmatpush1.bf16.msra.mxu0 %v1376
        %1512 = vmatprep.subr.bf16.mxu0 0
        %1513 = vmatpush1.bf16.msra.mxu0 %v1377
        %1514 = vmatprep.subr.bf16.mxu0 0
        %1515 = vmatpush1.bf16.msra.mxu0 %v1378
        %1516 = vmatprep.subr.bf16.mxu0 0
        %1517 = vmatpush1.bf16.msra.mxu0 %v1379
        %1518 = vmatprep.subr.bf16.mxu0 0
        %1519 = vmatpush1.bf16.msra.mxu0 %v1380
        %1520 = vmatprep.subr.bf16.mxu0 0
        %1521 = vmatpush1.bf16.msra.mxu0 %v1381
        %1522 = vmatprep.subr.bf16.mxu0 0
        %1523 = vmatpush1.bf16.msra.mxu0 %v1382
        %1524 = vmatprep.subr.bf16.mxu0 0
        %1525 = vmatpush1.bf16.msra.mxu0 %v1383
        %1526 = vmatprep.subr.bf16.mxu0 0
        %1527 = vmatpush1.bf16.msra.mxu0 %v1384
        %1528 = vmatprep.subr.bf16.mxu0 0
        %1529 = vmatpush1.bf16.msra.mxu0 %v1385
        %1530 = vmatprep.mubr.bf16.mxu0 %v955
        %1531 = vmatmul.mubr.bf16.gmra.mrb[0].mxu0 %v954
        %v1532 = vpop.f32.mrb[0].mxu0
        %v1533 = vadd.f32 0.0, %v1532
        %v1534 = vpop.f32.mrb[0].mxu0
        %v1535 = vpop.f32.mrb[0].mxu0
        %v1536 = vadd.f32 0.0, %v1535
        %v1537 = vpop.f32.mrb[0].mxu0
        %1538 = vmatprep.mubr.bf16.mxu0 %v963
        %1539 = vmatmul.mubr.bf16.gmra.mrb[0].mxu0 %v962
        %v1540 = vpop.f32.mrb[0].mxu0
        %v1541 = vadd.f32 0.0, %v1540
        %v1542 = vpop.f32.mrb[0].mxu0
        %v1543 = vpop.f32.mrb[0].mxu0
        %v1544 = vadd.f32 0.0, %v1543
        %v1545 = vpop.f32.mrb[0].mxu0
        %1546 = vmatprep.mubr.bf16.mxu0 %v971
        %1547 = vmatmul.mubr.bf16.gmra.mrb[0].mxu0 %v970
        %v1548 = vpop.f32.mrb[0].mxu0
        %v1549 = vadd.f32 0.0, %v1548
        %v1550 = vpop.f32.mrb[0].mxu0
        %v1551 = vpop.f32.mrb[0].mxu0
        %v1552 = vadd.f32 0.0, %v1551
        %v1553 = vpop.f32.mrb[0].mxu0
        %1554 = vmatprep.mubr.bf16.mxu0 %v979
        %1555 = vmatmul.mubr.bf16.gmra.mrb[0].mxu0 %v978
        %v1556 = vpop.f32.mrb[0].mxu0
        %v1557 = vadd.f32 0.0, %v1556
        %v1558 = vpop.f32.mrb[0].mxu0
        %v1559 = vpop.f32.mrb[0].mxu0
        %v1560 = vadd.f32 0.0, %v1559
        %v1561 = vpop.f32.mrb[0].mxu0
        %1562 = vdwg.mxu0
        %1563 = vmatprep.subr.bf16.mxu0 0
        %1564 = vmatpush1.bf16.msra.mxu0 %v1386
        %1565 = vmatprep.subr.bf16.mxu0 0
        %1566 = vmatpush1.bf16.msra.mxu0 %v1387
        %1567 = vmatprep.subr.bf16.mxu0 0
        %1568 = vmatpush1.bf16.msra.mxu0 %v1388
        %1569 = vmatprep.subr.bf16.mxu0 0
        %1570 = vmatpush1.bf16.msra.mxu0 %v1389
        %1571 = vmatprep.subr.bf16.mxu0 0
        %1572 = vmatpush1.bf16.msra.mxu0 %v1390
        %1573 = vmatprep.subr.bf16.mxu0 0
        %1574 = vmatpush1.bf16.msra.mxu0 %v1391
        %1575 = vmatprep.subr.bf16.mxu0 0
        %1576 = vmatpush1.bf16.msra.mxu0 %v1392
        %1577 = vmatprep.subr.bf16.mxu0 0
        %1578 = vmatpush1.bf16.msra.mxu0 %v1393
        %1579 = vmatprep.subr.bf16.mxu0 0
        %1580 = vmatpush1.bf16.msra.mxu0 %v1394
        %1581 = vmatprep.subr.bf16.mxu0 0
        %1582 = vmatpush1.bf16.msra.mxu0 %v1395
        %1583 = vmatprep.subr.bf16.mxu0 0
        %1584 = vmatpush1.bf16.msra.mxu0 %v1396
        %1585 = vmatprep.subr.bf16.mxu0 0
        %1586 = vmatpush1.bf16.msra.mxu0 %v1397
        %1587 = vmatprep.subr.bf16.mxu0 0
        %1588 = vmatpush1.bf16.msra.mxu0 %v1398
        %1589 = vmatprep.subr.bf16.mxu0 0
        %1590 = vmatpush1.bf16.msra.mxu0 %v1399
        %1591 = vmatprep.subr.bf16.mxu0 0
        %1592 = vmatpush1.bf16.msra.mxu0 %v1400
        %1593 = vmatprep.subr.bf16.mxu0 0
        %1594 = vmatpush1.bf16.msra.mxu0 %v1401
        %1595 = vmatprep.mubr.bf16.mxu0 %v957
        %1596 = vmatmul.mubr.bf16.gmra.mrb[0].mxu0 %v956
        %v1597 = vpop.f32.mrb[0].mxu0
        %v1598 = vadd.f32 %v1533, %v1597
        %v1599 = vpop.f32.mrb[0].mxu0
        %v1600 = vpop.f32.mrb[0].mxu0
        %v1601 = vadd.f32 %v1536, %v1600
        %v1602 = vpop.f32.mrb[0].mxu0
        %1603 = vmatprep.mubr.bf16.mxu0 %v965
        %1604 = vmatmul.mubr.bf16.gmra.mrb[0].mxu0 %v964
        %v1605 = vpop.f32.mrb[0].mxu0
        %v1606 = vadd.f32 %v1541, %v1605
        %v1607 = vpop.f32.mrb[0].mxu0
        %v1608 = vpop.f32.mrb[0].mxu0
        %v1609 = vadd.f32 %v1544, %v1608
        %v1610 = vpop.f32.mrb[0].mxu0
        %1611 = vmatprep.mubr.bf16.mxu0 %v973
        %1612 = vmatmul.mubr.bf16.gmra.mrb[0].mxu0 %v972
        %v1613 = vpop.f32.mrb[0].mxu0
        %v1614 = vadd.f32 %v1549, %v1613
        %v1615 = vpop.f32.mrb[0].mxu0
        %v1616 = vpop.f32.mrb[0].mxu0
        %v1617 = vadd.f32 %v1552, %v1616
        %v1618 = vpop.f32.mrb[0].mxu0
        %1619 = vmatprep.mubr.bf16.mxu0 %v981
        %1620 = vmatmul.mubr.bf16.gmra.mrb[0].mxu0 %v980
        %v1621 = vpop.f32.mrb[0].mxu0
        %v1622 = vadd.f32 %v1557, %v1621
        %v1623 = vpop.f32.mrb[0].mxu0
        %v1624 = vpop.f32.mrb[0].mxu0
        %v1625 = vadd.f32 %v1560, %v1624
        %v1626 = vpop.f32.mrb[0].mxu0
        %1627 = vdwg.mxu0
        %1628 = vmatprep.subr.bf16.mxu0 0
        %1629 = vmatpush1.bf16.msra.mxu0 %v1402
        %1630 = vmatprep.subr.bf16.mxu0 0
        %1631 = vmatpush1.bf16.msra.mxu0 %v1403
        %1632 = vmatprep.subr.bf16.mxu0 0
        %1633 = vmatpush1.bf16.msra.mxu0 %v1404
        %1634 = vmatprep.subr.bf16.mxu0 0
        %1635 = vmatpush1.bf16.msra.mxu0 %v1405
        %1636 = vmatprep.subr.bf16.mxu0 0
        %1637 = vmatpush1.bf16.msra.mxu0 %v1406
        %1638 = vmatprep.subr.bf16.mxu0 0
        %1639 = vmatpush1.bf16.msra.mxu0 %v1407
        %1640 = vmatprep.subr.bf16.mxu0 0
        %1641 = vmatpush1.bf16.msra.mxu0 %v1408
        %1642 = vmatprep.subr.bf16.mxu0 0
        %1643 = vmatpush1.bf16.msra.mxu0 %v1409
        %1644 = vmatprep.subr.bf16.mxu0 0
        %1645 = vmatpush1.bf16.msra.mxu0 %v1410
        %1646 = vmatprep.subr.bf16.mxu0 0
        %1647 = vmatpush1.bf16.msra.mxu0 %v1411
        %1648 = vmatprep.subr.bf16.mxu0 0
        %1649 = vmatpush1.bf16.msra.mxu0 %v1412
        %1650 = vmatprep.subr.bf16.mxu0 0
        %1651 = vmatpush1.bf16.msra.mxu0 %v1413
        %1652 = vmatprep.subr.bf16.mxu0 0
        %1653 = vmatpush1.bf16.msra.mxu0 %v1414
        %1654 = vmatprep.subr.bf16.mxu0 0
        %1655 = vmatpush1.bf16.msra.mxu0 %v1415
        %1656 = vmatprep.subr.bf16.mxu0 0
        %1657 = vmatpush1.bf16.msra.mxu0 %v1416
        %1658 = vmatprep.subr.bf16.mxu0 0
        %1659 = vmatpush1.bf16.msra.mxu0 %v1417
        %1660 = vmatprep.mubr.bf16.mxu0 %v959
        %1661 = vmatmul.mubr.bf16.gmra.mrb[0].mxu0 %v958
        %v1662 = vpop.f32.mrb[0].mxu0
        %v1663 = vadd.f32 %v1598, %v1662
        %v1664 = vpop.f32.mrb[0].mxu0
        %v1665 = vpop.f32.mrb[0].mxu0
        %v1666 = vadd.f32 %v1601, %v1665
        %v1667 = vpop.f32.mrb[0].mxu0
        %1668 = vmatprep.mubr.bf16.mxu0 %v967
        %1669 = vmatmul.mubr.bf16.gmra.mrb[0].mxu0 %v966
        %v1670 = vpop.f32.mrb[0].mxu0
        %v1671 = vadd.f32 %v1606, %v1670
        %v1672 = vpop.f32.mrb[0].mxu0
        %v1673 = vpop.f32.mrb[0].mxu0
        %v1674 = vadd.f32 %v1609, %v1673
        %v1675 = vpop.f32.mrb[0].mxu0
        %1676 = vmatprep.mubr.bf16.mxu0 %v975
        %1677 = vmatmul.mubr.bf16.gmra.mrb[0].mxu0 %v974
        %v1678 = vpop.f32.mrb[0].mxu0
        %v1679 = vadd.f32 %v1614, %v1678
        %v1680 = vpop.f32.mrb[0].mxu0
        %v1681 = vpop.f32.mrb[0].mxu0
        %v1682 = vadd.f32 %v1617, %v1681
        %v1683 = vpop.f32.mrb[0].mxu0
        %1684 = vmatprep.mubr.bf16.mxu0 %v983
        %1685 = vmatmul.mubr.bf16.gmra.mrb[0].mxu0 %v982
        %v1686 = vpop.f32.mrb[0].mxu0
        %v1687 = vadd.f32 %v1622, %v1686
        %v1688 = vpop.f32.mrb[0].mxu0
        %v1689 = vpop.f32.mrb[0].mxu0
        %v1690 = vadd.f32 %v1625, %v1689
        %v1691 = vpop.f32.mrb[0].mxu0
        %1692 = vdwg.mxu0
        %1693 = vmatprep.subr.bf16.mxu0 0
        %1694 = vmatpush1.bf16.msra.mxu0 %v1418
        %1695 = vmatprep.subr.bf16.mxu0 0
        %1696 = vmatpush1.bf16.msra.mxu0 %v1419
        %1697 = vmatprep.subr.bf16.mxu0 0
        %1698 = vmatpush1.bf16.msra.mxu0 %v1420
        %1699 = vmatprep.subr.bf16.mxu0 0
        %1700 = vmatpush1.bf16.msra.mxu0 %v1421
        %1701 = vmatprep.subr.bf16.mxu0 0
        %1702 = vmatpush1.bf16.msra.mxu0 %v1422
        %1703 = vmatprep.subr.bf16.mxu0 0
        %1704 = vmatpush1.bf16.msra.mxu0 %v1423
        %1705 = vmatprep.subr.bf16.mxu0 0
        %1706 = vmatpush1.bf16.msra.mxu0 %v1424
        %1707 = vmatprep.subr.bf16.mxu0 0
        %1708 = vmatpush1.bf16.msra.mxu0 %v1425
        %1709 = vmatprep.subr.bf16.mxu0 0
        %1710 = vmatpush1.bf16.msra.mxu0 %v1426
        %1711 = vmatprep.subr.bf16.mxu0 0
        %1712 = vmatpush1.bf16.msra.mxu0 %v1427
        %1713 = vmatprep.subr.bf16.mxu0 0
        %1714 = vmatpush1.bf16.msra.mxu0 %v1428
        %1715 = vmatprep.subr.bf16.mxu0 0
        %1716 = vmatpush1.bf16.msra.mxu0 %v1429
        %1717 = vmatprep.subr.bf16.mxu0 0
        %1718 = vmatpush1.bf16.msra.mxu0 %v1430
        %1719 = vmatprep.subr.bf16.mxu0 0
        %1720 = vmatpush1.bf16.msra.mxu0 %v1431
        %1721 = vmatprep.subr.bf16.mxu0 0
        %1722 = vmatpush1.bf16.msra.mxu0 %v1432
        %1723 = vmatprep.subr.bf16.mxu0 0
        %1724 = vmatpush1.bf16.msra.mxu0 %v1433
        %1725 = vmatprep.mubr.bf16.mxu0 %v961
        %1726 = vmatmul.mubr.bf16.gmra.mrb[0].mxu0 %v960
        %v1727 = vpop.f32.mrb[0].mxu0
        %v1728 = vadd.f32 %v1663, %v1727
        %v1729 = vpop.f32.mrb[0].mxu0
        %v1730 = vpop.f32.mrb[0].mxu0
        %v1731 = vadd.f32 %v1666, %v1730
        %v1732 = vpop.f32.mrb[0].mxu0
        %1733 = vmatprep.mubr.bf16.mxu0 %v969
        %1734 = vmatmul.mubr.bf16.gmra.mrb[0].mxu0 %v968
        %v1735 = vpop.f32.mrb[0].mxu0
        %v1736 = vadd.f32 %v1671, %v1735
        %v1737 = vpop.f32.mrb[0].mxu0
        %v1738 = vpop.f32.mrb[0].mxu0
        %v1739 = vadd.f32 %v1674, %v1738
        %v1740 = vpop.f32.mrb[0].mxu0
        %1741 = vmatprep.mubr.bf16.mxu0 %v977
        %1742 = vmatmul.mubr.bf16.gmra.mrb[0].mxu0 %v976
        %v1743 = vpop.f32.mrb[0].mxu0
        %v1744 = vadd.f32 %v1679, %v1743
        %v1745 = vpop.f32.mrb[0].mxu0
        %v1746 = vpop.f32.mrb[0].mxu0
        %v1747 = vadd.f32 %v1682, %v1746
        %v1748 = vpop.f32.mrb[0].mxu0
        %1749 = vmatprep.mubr.bf16.mxu0 %v985
        %1750 = vmatmul.mubr.bf16.gmra.mrb[0].mxu0 %v984
        %v1751 = vpop.f32.mrb[0].mxu0
        %v1752 = vadd.f32 %v1687, %v1751
        %v1753 = vpop.f32.mrb[0].mxu0
        %v1754 = vpop.f32.mrb[0].mxu0
        %v1755 = vadd.f32 %v1690, %v1754
        %v1756 = vpop.f32.mrb[0].mxu0
        %1757 = vdwg.mxu0
        %v1758 = vmul.f32 %v1728, 0.25
        %v1759 = vmul.f32 %v1731, 0.25
        %v1760 = vmul.f32 %v1736, 0.25
        %v1761 = vmul.f32 %v1739, 0.25
        %v1762 = vmul.f32 %v1744, 0.25
        %v1763 = vmul.f32 %v1747, 0.25
        %v1764 = vmul.f32 %v1752, 0.25
        %v1765 = vmul.f32 %v1755, 0.25
        %v1766 = vld [vmem:[%s4] sm:$0x1]
        %v1768 = vlaneseq
        %v1769 = vshrl.u32 %v1768, 7
        %v1770 = vsub.s32 0, %v1769
        %v1771 = vrot.slane %v1766, %v1770
        %v1773 = vadd.f32 %v1758, %v1771
        %v1774 = vadd.f32 %v1759, %v1771
        %v1775 = vadd.f32 %v1760, %v1771
        %v1776 = vadd.f32 %v1761, %v1771
        %v1777 = vadd.f32 %v1762, %v1771
        %v1778 = vadd.f32 %v1763, %v1771
        %v1779 = vadd.f32 %v1764, %v1771
        %v1780 = vadd.f32 %v1765, %v1771
        %1781 = vst [vmem:[%s220] sm:$0xff] %v1773
        %1782 = vst [vmem:[%s220 + $0x8] sm:$0xff] %v1774
        %1783 = vst [vmem:[%s220 + $0x10] sm:$0xff] %v1775
        %1784 = vst [vmem:[%s220 + $0x18] sm:$0xff] %v1776
        %1785 = vst [vmem:[%s220 + $0x20] sm:$0xff] %v1777
        %1786 = vst [vmem:[%s220 + $0x28] sm:$0xff] %v1778
        %1787 = vst [vmem:[%s220 + $0x30] sm:$0xff] %v1779
        %1788 = vst [vmem:[%s220 + $0x38] sm:$0xff] %v1780
        %s1789 = sand.u32 %s137, 1
        %s1790 = scalar_lea.sflag [#allocation3], %s1789
        %s1791 = sand.u32 %s137, 1
        %s1792 = smul.addr %s1791, 64
        %s1793 = scalar_lea.vmem [#allocation2], %s1792
        // Predicated region
        $region41: #{transition_layer.1} parent=39 // pred_check
          %p1794 = pneg %p147
        $region42: #{transition_layer.1} parent=39 // pred_check_branch
          %1796 = sbr.rel (%p1794) target = $region44
        $region43: #{transition_layer.1} parent=39 // pred_region
          %s1797 = smul.u32 8, %s19
          %s1799 = ssub.s32 1024, 1024
          %1800 = vsyncadd %s1790, %s1799
          %s1801 = smul.addr %s1797, 128
          %s1802 = scalar_lea.hbm %s5, %s1801
          %s1803 = sshll.u32 %s1793, 4
          %s1804 = int_to_ptr.vmem [resolvable:$true] %s1803
          %1809 = dma.vmem_to_hbm [thread:$0]  %s1804, 1024, %s1802, %s1790, 128, 128, 8
        $region44: #{transition_layer.1} parent=39 // pred_fallthru
          _
      $region40: #{transition_layer.1} parent=5 // pred_fallthru
        _
      %p1810 = scmp.le.s32.totalorder 2, %s14
      // Predicated region
      $region45: #{transition_layer.1} parent=5 // pred_check
        %p1811 = pneg %p1810
      $region46: #{transition_layer.1} parent=5 // pred_check_branch
        %1813 = sbr.rel (%p1811) target = $region48
      $region47: #{transition_layer.1} parent=5 // pred_region
        %s1814 = ssub.s32 %s14, 2
        // Predicated region
        $region49: #{transition_layer.1} parent=47 // pred_check
          %p1815 = pneg %p153
        $region50: #{transition_layer.1} parent=47 // pred_check_branch
          %1817 = sbr.rel (%p1815) target = $region52
        $region51: #{transition_layer.1} parent=47 // pred_region
          %s1818 = sand.u32 %s138, 1
          %s1819 = scalar_lea.sflag [#allocation3], %s1818
          %s1820 = sand.u32 %s138, 1
          %s1821 = smul.addr %s1820, 64
          %s1822 = scalar_lea.vmem [#allocation2], %s1821
          %1823 = dma.done %s1819, 1024
        $region52: #{transition_layer.1} parent=47 // pred_fallthru
          _
      $region48: #{transition_layer.1} parent=5 // pred_fallthru
        _
    $region6: #{transition_layer.1} parent=1 // loop_footer
      %s18 = sadd.s32 1, %s14
    $region7: #{transition_layer.1} parent=1 // loop_footer_branch
      %13 = sbr.rel target = $region3
    $region8: #{transition_layer.1} parent=1 // loop_exit
      _
    %1824 = vsyncpa [#allocation3], 1
    %s1825 = scalar_lea.sflag [#allocation3], 1
    %1826 = vsyncpa %s1825, 1

</llo_original>
